<compile_context>
chip_gen: v5e
topology: v5e:2x2
jax: 0.10.0
libtpu: 0.0.40
codegen_flags: <defaults>
</compile_context>

<pallas_src>
import jax
import jax.numpy as jnp
from jax.experimental import pallas as pl
from jax.experimental.pallas import tpu as pltpu  # noqa: F401  (kept for TPU-specific tuning)


# ------------------------------ fused decoder kernel ------------------------------ #

def _make_decoder_kernel(num_layers, T, B, D, H, F):
    """Build the fused kernel for a fixed (static) layer count / shapes."""

    def kernel(*refs):
        it = iter(refs)
        x_ref = next(it)                           # (T*B, D) time-major, flattened input
        wih_refs, bias_refs, whh_refs = [], [], []
        for _ in range(num_layers):
            wih_refs.append(next(it))              # W_ih^T : (D or H, 4H)
            bias_refs.append(next(it))             # b_ih + b_hh : (1, 4H)
            whh_refs.append(next(it))              # W_hh^T : (H, 4H)
        wfc_ref = next(it)                         # (H, F)
        bfc_ref = next(it)                         # (1, F)
        out_ref = next(it)                         # (B, F)

        def lstm_cell(p_t, h, c, whh):
            # p_t already holds x_t @ W_ih^T + (b_ih + b_hh); only the recurrent matmul
            # sits on the serial critical path.
            gates = p_t + jnp.dot(h, whh, preferred_element_type=jnp.float32)   # (B, 4H)
            i_g = jax.nn.sigmoid(gates[:, 0 * H:1 * H])
            f_g = jax.nn.sigmoid(gates[:, 1 * H:2 * H])
            g_g = jnp.tanh(gates[:, 2 * H:3 * H])
            o_g = jax.nn.sigmoid(gates[:, 3 * H:4 * H])
            c_n = f_g * c + i_g * g_g
            h_n = o_g * jnp.tanh(c_n)
            return h_n, c_n

        seq = x_ref[...].astype(jnp.float32)       # (T*B, in_dim) for the current layer
        h = None
        for l in range(num_layers):
            # Batched input projection for this layer: ONE (T*B, in) @ (in, 4H) MXU matmul.
            proj = (jnp.dot(seq, wih_refs[l][...],
                            preferred_element_type=jnp.float32)
                    + bias_refs[l][...])                                        # (T*B, 4H)
            whh = whh_refs[l][...]                 # hoisted resident-weight load
            h = jnp.zeros((B, H), jnp.float32)
            c = jnp.zeros((B, H), jnp.float32)
            last = (l == num_layers - 1)
            hs = []
            for t in range(T):                     # statically unrolled recurrence
                h, c = lstm_cell(proj[t * B:(t + 1) * B, :], h, c, whh)
                if not last:                       # last layer only needs h at t = T-1
                    hs.append(h)
            if not last:
                seq = jnp.concatenate(hs, axis=0)  # (T*B, H) stays in vregs/VMEM

        # ---------------- fused FC head on the final hidden state ---------------- #
        out_ref[...] = (jnp.dot(h, wfc_ref[...], preferred_element_type=jnp.float32)
                        + bfc_ref[...]).astype(out_ref.dtype)

    return kernel


# --------------------------------- forward pass --------------------------------- #

def lstm_decoder_forward(x_btd, layer_params, fc_w, fc_b):
    """x_btd: (B, T, num_features) batch-first, same as the PyTorch module."""
    B, T, D = x_btd.shape
    H = layer_params[0][1].shape[1]                # w_hh: (4H, H)
    F = fc_w.shape[0]
    L = len(layer_params)

    # Layout plumbing only (no compute hoisted out of the kernel): batch-first -> time-major,
    # flattened to (T*B, D); weights pre-transposed so every in-kernel matmul is lane-dense.
    x_flat = jnp.transpose(x_btd, (1, 0, 2)).reshape(T * B, D).astype(jnp.float32)

    args = [x_flat]
    for (w_ih, w_hh, b_ih, b_hh) in layer_params:
        args.append(jnp.transpose(w_ih).astype(jnp.float32))            # (in, 4H)
        args.append((b_ih + b_hh).reshape(1, 4 * H).astype(jnp.float32))
        args.append(jnp.transpose(w_hh).astype(jnp.float32))            # (H, 4H)
    args.append(jnp.transpose(fc_w).astype(jnp.float32))                # (H, F)
    args.append(fc_b.reshape(1, F).astype(jnp.float32))                 # (1, F)

    kernel = _make_decoder_kernel(L, T, B, D, H, F)
    return pl.pallas_call(
        kernel,
        out_shape=jax.ShapeDtypeStruct((B, F), jnp.float32),
    )(*args)


# ------------------------------ pure-JAX reference ------------------------------ #

def lstm_decoder_ref(x_btd, layer_params, fc_w, fc_b):
    B = x_btd.shape[0]
    inp = x_btd
    for (w_ih, w_hh, b_ih, b_hh) in layer_params:
        H = w_hh.shape[1]

        def step(carry, xt):
            h, c = carry
            gates = xt @ w_ih.T + h @ w_hh.T + b_ih + b_hh
            i = jax.nn.sigmoid(gates[:, :H])
            f = jax.nn.sigmoid(gates[:, H:2 * H])
            g = jnp.tanh(gates[:, 2 * H:3 * H])
            o = jax.nn.sigmoid(gates[:, 3 * H:])
            c = f * c + i * g
            h = o * jnp.tanh(c)
            return (h, c), h

        init = (jnp.zeros((B, H), jnp.float32), jnp.zeros((B, H), jnp.float32))
        _, ys = jax.lax.scan(step, init, jnp.transpose(inp, (1, 0, 2)))
        inp = jnp.transpose(ys, (1, 0, 2))
    last = inp[:, -1, :]
    return last @ fc_w.T + fc_b


# ------------------------------------ main ------------------------------------ #

if __name__ == "__main__":
    # Small shapes implied by the forward: x is (batch, seq, num_features).
    B, T = 2, 8
    num_features, hidden_size, num_layers = 4, 32, 2

    key = jax.random.PRNGKey(0)
    keys = jax.random.split(key, 2 + 4 * num_layers + 2)

    x = jax.random.normal(keys[0], (B, T, num_features), dtype=jnp.float32)

    scale = 1.0 / jnp.sqrt(hidden_size)
    layer_params = []
    k_idx = 1
    for layer in range(num_layers):
        in_dim = num_features if layer == 0 else hidden_size
        w_ih = scale * jax.random.normal(keys[k_idx + 0], (4 * hidden_size, in_dim), jnp.float32)
        w_hh = scale * jax.random.normal(keys[k_idx + 1], (4 * hidden_size, hidden_size), jnp.float32)
        b_ih = scale * jax.random.normal(keys[k_idx + 2], (4 * hidden_size,), jnp.float32)
        b_hh = scale * jax.random.normal(keys[k_idx + 3], (4 * hidden_size,), jnp.float32)
        layer_params.append((w_ih, w_hh, b_ih, b_hh))
        k_idx += 4

    fc_w = scale * jax.random.normal(keys[k_idx + 0], (num_features, hidden_size), jnp.float32)
    fc_b = scale * jax.random.normal(keys[k_idx + 1], (num_features,), jnp.float32)

    fwd = jax.jit(lstm_decoder_forward)
    out = fwd(x, layer_params, fc_w, fc_b)
    out = jax.block_until_ready(out)

    ref = lstm_decoder_ref(x, layer_params, fc_w, fc_b)
    assert out.shape == (B, num_features)
    assert jnp.allclose(out, ref, rtol=1e-4, atol=1e-4), (out, ref)

    print("KERNEL_OK")
</pallas_src>

<mosaic_0001>
module attributes {stable_mosaic.version = 11 : i64} {
  func.func @kernel(%arg0: memref<16x4xf32, #tpu.memory_space<vmem>>, %arg1: memref<4x128xf32, #tpu.memory_space<vmem>>, %arg2: memref<1x128xf32, #tpu.memory_space<vmem>>, %arg3: memref<32x128xf32, #tpu.memory_space<vmem>>, %arg4: memref<32x128xf32, #tpu.memory_space<vmem>>, %arg5: memref<1x128xf32, #tpu.memory_space<vmem>>, %arg6: memref<32x128xf32, #tpu.memory_space<vmem>>, %arg7: memref<32x4xf32, #tpu.memory_space<vmem>>, %arg8: memref<1x4xf32, #tpu.memory_space<vmem>>, %arg9: memref<2x4xf32, #tpu.memory_space<vmem>>) attributes {dimension_semantics = [], scalar_prefetch = 0 : i64, scratch_operands = 0 : i64, tpu.core_type = #tpu.core_type<tc>} {
    %c0 = arith.constant 0 : index
    %c0_0 = arith.constant 0 : index
    %0 = vector.load %arg0[%c0, %c0_0] : memref<16x4xf32, #tpu.memory_space<vmem>>, vector<16x4xf32>
    %c0_1 = arith.constant 0 : index
    %c0_2 = arith.constant 0 : index
    %1 = vector.load %arg1[%c0_1, %c0_2] : memref<4x128xf32, #tpu.memory_space<vmem>>, vector<4x128xf32>
    %cst = arith.constant dense<0.000000e+00> : vector<16x128xf32>
    %2 = tpu.matmul %0, %1, %cst {dimension_numbers = #tpu.dot_dimension_numbers<[1], [0], [0], [1], [0, 0, 1, 1], [], []>} : vector<16x4xf32>, vector<4x128xf32>, vector<16x128xf32> -> vector<16x128xf32>
    %c0_3 = arith.constant 0 : index
    %c0_4 = arith.constant 0 : index
    %3 = vector.load %arg2[%c0_3, %c0_4] : memref<1x128xf32, #tpu.memory_space<vmem>>, vector<1x128xf32>
    %4 = vector.broadcast %3 : vector<1x128xf32> to vector<16x128xf32>
    %5 = arith.addf %2, %4 : vector<16x128xf32>
    %c0_5 = arith.constant 0 : index
    %c0_6 = arith.constant 0 : index
    %6 = vector.load %arg3[%c0_5, %c0_6] : memref<32x128xf32, #tpu.memory_space<vmem>>, vector<32x128xf32>
    %cst_7 = arith.constant 0.000000e+00 : f32
    %7 = vector.broadcast %cst_7 : f32 to vector<2x32xf32>
    %cst_8 = arith.constant 0.000000e+00 : f32
    %8 = vector.broadcast %cst_8 : f32 to vector<2x32xf32>
    %9 = vector.extract_strided_slice %5 {offsets = [0, 0], sizes = [2, 128], strides = [1, 1]} : vector<16x128xf32> to vector<2x128xf32>
    %cst_9 = arith.constant dense<0.000000e+00> : vector<2x128xf32>
    %10 = tpu.matmul %7, %6, %cst_9 {dimension_numbers = #tpu.dot_dimension_numbers<[1], [0], [0], [1], [0, 0, 1, 1], [], []>} : vector<2x32xf32>, vector<32x128xf32>, vector<2x128xf32> -> vector<2x128xf32>
    %11 = arith.addf %9, %10 : vector<2x128xf32>
    %12 = vector.extract_strided_slice %11 {offsets = [0, 0], sizes = [2, 32], strides = [1, 1]} : vector<2x128xf32> to vector<2x32xf32>
    %13 = arith.negf %12 : vector<2x32xf32>
    %14 = math.exp %13 : vector<2x32xf32>
    %cst_10 = arith.constant 1.000000e+00 : f32
    %15 = vector.broadcast %cst_10 : f32 to vector<2x32xf32>
    %16 = arith.addf %15, %14 : vector<2x32xf32>
    %17 = arith.divf %15, %16 : vector<2x32xf32>
    %18 = vector.extract_strided_slice %11 {offsets = [0, 32], sizes = [2, 32], strides = [1, 1]} : vector<2x128xf32> to vector<2x32xf32>
    %19 = arith.negf %18 : vector<2x32xf32>
    %20 = math.exp %19 : vector<2x32xf32>
    %cst_11 = arith.constant 1.000000e+00 : f32
    %21 = vector.broadcast %cst_11 : f32 to vector<2x32xf32>
    %22 = arith.addf %21, %20 : vector<2x32xf32>
    %23 = arith.divf %21, %22 : vector<2x32xf32>
    %24 = vector.extract_strided_slice %11 {offsets = [0, 64], sizes = [2, 32], strides = [1, 1]} : vector<2x128xf32> to vector<2x32xf32>
    %25 = math.tanh %24 : vector<2x32xf32>
    %26 = vector.extract_strided_slice %11 {offsets = [0, 96], sizes = [2, 32], strides = [1, 1]} : vector<2x128xf32> to vector<2x32xf32>
    %27 = arith.negf %26 : vector<2x32xf32>
    %28 = math.exp %27 : vector<2x32xf32>
    %cst_12 = arith.constant 1.000000e+00 : f32
    %29 = vector.broadcast %cst_12 : f32 to vector<2x32xf32>
    %30 = arith.addf %29, %28 : vector<2x32xf32>
    %31 = arith.divf %29, %30 : vector<2x32xf32>
    %32 = arith.mulf %23, %8 : vector<2x32xf32>
    %33 = arith.mulf %17, %25 : vector<2x32xf32>
    %34 = arith.addf %32, %33 : vector<2x32xf32>
    %35 = math.tanh %34 : vector<2x32xf32>
    %36 = arith.mulf %31, %35 : vector<2x32xf32>
    %37 = vector.extract_strided_slice %5 {offsets = [2, 0], sizes = [2, 128], strides = [1, 1]} : vector<16x128xf32> to vector<2x128xf32>
    %cst_13 = arith.constant dense<0.000000e+00> : vector<2x128xf32>
    %38 = tpu.matmul %36, %6, %cst_13 {dimension_numbers = #tpu.dot_dimension_numbers<[1], [0], [0], [1], [0, 0, 1, 1], [], []>} : vector<2x32xf32>, vector<32x128xf32>, vector<2x128xf32> -> vector<2x128xf32>
    %39 = arith.addf %37, %38 : vector<2x128xf32>
    %40 = vector.extract_strided_slice %39 {offsets = [0, 0], sizes = [2, 32], strides = [1, 1]} : vector<2x128xf32> to vector<2x32xf32>
    %41 = arith.negf %40 : vector<2x32xf32>
    %42 = math.exp %41 : vector<2x32xf32>
    %cst_14 = arith.constant 1.000000e+00 : f32
    %43 = vector.broadcast %cst_14 : f32 to vector<2x32xf32>
    %44 = arith.addf %43, %42 : vector<2x32xf32>
    %45 = arith.divf %43, %44 : vector<2x32xf32>
    %46 = vector.extract_strided_slice %39 {offsets = [0, 32], sizes = [2, 32], strides = [1, 1]} : vector<2x128xf32> to vector<2x32xf32>
    %47 = arith.negf %46 : vector<2x32xf32>
    %48 = math.exp %47 : vector<2x32xf32>
    %cst_15 = arith.constant 1.000000e+00 : f32
    %49 = vector.broadcast %cst_15 : f32 to vector<2x32xf32>
    %50 = arith.addf %49, %48 : vector<2x32xf32>
    %51 = arith.divf %49, %50 : vector<2x32xf32>
    %52 = vector.extract_strided_slice %39 {offsets = [0, 64], sizes = [2, 32], strides = [1, 1]} : vector<2x128xf32> to vector<2x32xf32>
    %53 = math.tanh %52 : vector<2x32xf32>
    %54 = vector.extract_strided_slice %39 {offsets = [0, 96], sizes = [2, 32], strides = [1, 1]} : vector<2x128xf32> to vector<2x32xf32>
    %55 = arith.negf %54 : vector<2x32xf32>
    %56 = math.exp %55 : vector<2x32xf32>
    %cst_16 = arith.constant 1.000000e+00 : f32
    %57 = vector.broadcast %cst_16 : f32 to vector<2x32xf32>
    %58 = arith.addf %57, %56 : vector<2x32xf32>
    %59 = arith.divf %57, %58 : vector<2x32xf32>
    %60 = arith.mulf %51, %34 : vector<2x32xf32>
    %61 = arith.mulf %45, %53 : vector<2x32xf32>
    %62 = arith.addf %60, %61 : vector<2x32xf32>
    %63 = math.tanh %62 : vector<2x32xf32>
    %64 = arith.mulf %59, %63 : vector<2x32xf32>
    %65 = vector.extract_strided_slice %5 {offsets = [4, 0], sizes = [2, 128], strides = [1, 1]} : vector<16x128xf32> to vector<2x128xf32>
    %cst_17 = arith.constant dense<0.000000e+00> : vector<2x128xf32>
    %66 = tpu.matmul %64, %6, %cst_17 {dimension_numbers = #tpu.dot_dimension_numbers<[1], [0], [0], [1], [0, 0, 1, 1], [], []>} : vector<2x32xf32>, vector<32x128xf32>, vector<2x128xf32> -> vector<2x128xf32>
    %67 = arith.addf %65, %66 : vector<2x128xf32>
    %68 = vector.extract_strided_slice %67 {offsets = [0, 0], sizes = [2, 32], strides = [1, 1]} : vector<2x128xf32> to vector<2x32xf32>
    %69 = arith.negf %68 : vector<2x32xf32>
    %70 = math.exp %69 : vector<2x32xf32>
    %cst_18 = arith.constant 1.000000e+00 : f32
    %71 = vector.broadcast %cst_18 : f32 to vector<2x32xf32>
    %72 = arith.addf %71, %70 : vector<2x32xf32>
    %73 = arith.divf %71, %72 : vector<2x32xf32>
    %74 = vector.extract_strided_slice %67 {offsets = [0, 32], sizes = [2, 32], strides = [1, 1]} : vector<2x128xf32> to vector<2x32xf32>
    %75 = arith.negf %74 : vector<2x32xf32>
    %76 = math.exp %75 : vector<2x32xf32>
    %cst_19 = arith.constant 1.000000e+00 : f32
    %77 = vector.broadcast %cst_19 : f32 to vector<2x32xf32>
    %78 = arith.addf %77, %76 : vector<2x32xf32>
    %79 = arith.divf %77, %78 : vector<2x32xf32>
    %80 = vector.extract_strided_slice %67 {offsets = [0, 64], sizes = [2, 32], strides = [1, 1]} : vector<2x128xf32> to vector<2x32xf32>
    %81 = math.tanh %80 : vector<2x32xf32>
    %82 = vector.extract_strided_slice %67 {offsets = [0, 96], sizes = [2, 32], strides = [1, 1]} : vector<2x128xf32> to vector<2x32xf32>
    %83 = arith.negf %82 : vector<2x32xf32>
    %84 = math.exp %83 : vector<2x32xf32>
    %cst_20 = arith.constant 1.000000e+00 : f32
    %85 = vector.broadcast %cst_20 : f32 to vector<2x32xf32>
    %86 = arith.addf %85, %84 : vector<2x32xf32>
    %87 = arith.divf %85, %86 : vector<2x32xf32>
    %88 = arith.mulf %79, %62 : vector<2x32xf32>
    %89 = arith.mulf %73, %81 : vector<2x32xf32>
    %90 = arith.addf %88, %89 : vector<2x32xf32>
    %91 = math.tanh %90 : vector<2x32xf32>
    %92 = arith.mulf %87, %91 : vector<2x32xf32>
    %93 = vector.extract_strided_slice %5 {offsets = [6, 0], sizes = [2, 128], strides = [1, 1]} : vector<16x128xf32> to vector<2x128xf32>
    %cst_21 = arith.constant dense<0.000000e+00> : vector<2x128xf32>
    %94 = tpu.matmul %92, %6, %cst_21 {dimension_numbers = #tpu.dot_dimension_numbers<[1], [0], [0], [1], [0, 0, 1, 1], [], []>} : vector<2x32xf32>, vector<32x128xf32>, vector<2x128xf32> -> vector<2x128xf32>
    %95 = arith.addf %93, %94 : vector<2x128xf32>
    %96 = vector.extract_strided_slice %95 {offsets = [0, 0], sizes = [2, 32], strides = [1, 1]} : vector<2x128xf32> to vector<2x32xf32>
    %97 = arith.negf %96 : vector<2x32xf32>
    %98 = math.exp %97 : vector<2x32xf32>
    %cst_22 = arith.constant 1.000000e+00 : f32
    %99 = vector.broadcast %cst_22 : f32 to vector<2x32xf32>
    %100 = arith.addf %99, %98 : vector<2x32xf32>
    %101 = arith.divf %99, %100 : vector<2x32xf32>
    %102 = vector.extract_strided_slice %95 {offsets = [0, 32], sizes = [2, 32], strides = [1, 1]} : vector<2x128xf32> to vector<2x32xf32>
    %103 = arith.negf %102 : vector<2x32xf32>
    %104 = math.exp %103 : vector<2x32xf32>
    %cst_23 = arith.constant 1.000000e+00 : f32
    %105 = vector.broadcast %cst_23 : f32 to vector<2x32xf32>
    %106 = arith.addf %105, %104 : vector<2x32xf32>
    %107 = arith.divf %105, %106 : vector<2x32xf32>
    %108 = vector.extract_strided_slice %95 {offsets = [0, 64], sizes = [2, 32], strides = [1, 1]} : vector<2x128xf32> to vector<2x32xf32>
    %109 = math.tanh %108 : vector<2x32xf32>
    %110 = vector.extract_strided_slice %95 {offsets = [0, 96], sizes = [2, 32], strides = [1, 1]} : vector<2x128xf32> to vector<2x32xf32>
    %111 = arith.negf %110 : vector<2x32xf32>
    %112 = math.exp %111 : vector<2x32xf32>
    %cst_24 = arith.constant 1.000000e+00 : f32
    %113 = vector.broadcast %cst_24 : f32 to vector<2x32xf32>
    %114 = arith.addf %113, %112 : vector<2x32xf32>
    %115 = arith.divf %113, %114 : vector<2x32xf32>
    %116 = arith.mulf %107, %90 : vector<2x32xf32>
    %117 = arith.mulf %101, %109 : vector<2x32xf32>
    %118 = arith.addf %116, %117 : vector<2x32xf32>
    %119 = math.tanh %118 : vector<2x32xf32>
    %120 = arith.mulf %115, %119 : vector<2x32xf32>
    %121 = vector.extract_strided_slice %5 {offsets = [8, 0], sizes = [2, 128], strides = [1, 1]} : vector<16x128xf32> to vector<2x128xf32>
    %cst_25 = arith.constant dense<0.000000e+00> : vector<2x128xf32>
    %122 = tpu.matmul %120, %6, %cst_25 {dimension_numbers = #tpu.dot_dimension_numbers<[1], [0], [0], [1], [0, 0, 1, 1], [], []>} : vector<2x32xf32>, vector<32x128xf32>, vector<2x128xf32> -> vector<2x128xf32>
    %123 = arith.addf %121, %122 : vector<2x128xf32>
    %124 = vector.extract_strided_slice %123 {offsets = [0, 0], sizes = [2, 32], strides = [1, 1]} : vector<2x128xf32> to vector<2x32xf32>
    %125 = arith.negf %124 : vector<2x32xf32>
    %126 = math.exp %125 : vector<2x32xf32>
    %cst_26 = arith.constant 1.000000e+00 : f32
    %127 = vector.broadcast %cst_26 : f32 to vector<2x32xf32>
    %128 = arith.addf %127, %126 : vector<2x32xf32>
    %129 = arith.divf %127, %128 : vector<2x32xf32>
    %130 = vector.extract_strided_slice %123 {offsets = [0, 32], sizes = [2, 32], strides = [1, 1]} : vector<2x128xf32> to vector<2x32xf32>
    %131 = arith.negf %130 : vector<2x32xf32>
    %132 = math.exp %131 : vector<2x32xf32>
    %cst_27 = arith.constant 1.000000e+00 : f32
    %133 = vector.broadcast %cst_27 : f32 to vector<2x32xf32>
    %134 = arith.addf %133, %132 : vector<2x32xf32>
    %135 = arith.divf %133, %134 : vector<2x32xf32>
    %136 = vector.extract_strided_slice %123 {offsets = [0, 64], sizes = [2, 32], strides = [1, 1]} : vector<2x128xf32> to vector<2x32xf32>
    %137 = math.tanh %136 : vector<2x32xf32>
    %138 = vector.extract_strided_slice %123 {offsets = [0, 96], sizes = [2, 32], strides = [1, 1]} : vector<2x128xf32> to vector<2x32xf32>
    %139 = arith.negf %138 : vector<2x32xf32>
    %140 = math.exp %139 : vector<2x32xf32>
    %cst_28 = arith.constant 1.000000e+00 : f32
    %141 = vector.broadcast %cst_28 : f32 to vector<2x32xf32>
    %142 = arith.addf %141, %140 : vector<2x32xf32>
    %143 = arith.divf %141, %142 : vector<2x32xf32>
    %144 = arith.mulf %135, %118 : vector<2x32xf32>
    %145 = arith.mulf %129, %137 : vector<2x32xf32>
    %146 = arith.addf %144, %145 : vector<2x32xf32>
    %147 = math.tanh %146 : vector<2x32xf32>
    %148 = arith.mulf %143, %147 : vector<2x32xf32>
    %149 = vector.extract_strided_slice %5 {offsets = [10, 0], sizes = [2, 128], strides = [1, 1]} : vector<16x128xf32> to vector<2x128xf32>
    %cst_29 = arith.constant dense<0.000000e+00> : vector<2x128xf32>
    %150 = tpu.matmul %148, %6, %cst_29 {dimension_numbers = #tpu.dot_dimension_numbers<[1], [0], [0], [1], [0, 0, 1, 1], [], []>} : vector<2x32xf32>, vector<32x128xf32>, vector<2x128xf32> -> vector<2x128xf32>
    %151 = arith.addf %149, %150 : vector<2x128xf32>
    %152 = vector.extract_strided_slice %151 {offsets = [0, 0], sizes = [2, 32], strides = [1, 1]} : vector<2x128xf32> to vector<2x32xf32>
    %153 = arith.negf %152 : vector<2x32xf32>
    %154 = math.exp %153 : vector<2x32xf32>
    %cst_30 = arith.constant 1.000000e+00 : f32
    %155 = vector.broadcast %cst_30 : f32 to vector<2x32xf32>
    %156 = arith.addf %155, %154 : vector<2x32xf32>
    %157 = arith.divf %155, %156 : vector<2x32xf32>
    %158 = vector.extract_strided_slice %151 {offsets = [0, 32], sizes = [2, 32], strides = [1, 1]} : vector<2x128xf32> to vector<2x32xf32>
    %159 = arith.negf %158 : vector<2x32xf32>
    %160 = math.exp %159 : vector<2x32xf32>
    %cst_31 = arith.constant 1.000000e+00 : f32
    %161 = vector.broadcast %cst_31 : f32 to vector<2x32xf32>
    %162 = arith.addf %161, %160 : vector<2x32xf32>
    %163 = arith.divf %161, %162 : vector<2x32xf32>
    %164 = vector.extract_strided_slice %151 {offsets = [0, 64], sizes = [2, 32], strides = [1, 1]} : vector<2x128xf32> to vector<2x32xf32>
    %165 = math.tanh %164 : vector<2x32xf32>
    %166 = vector.extract_strided_slice %151 {offsets = [0, 96], sizes = [2, 32], strides = [1, 1]} : vector<2x128xf32> to vector<2x32xf32>
    %167 = arith.negf %166 : vector<2x32xf32>
    %168 = math.exp %167 : vector<2x32xf32>
    %cst_32 = arith.constant 1.000000e+00 : f32
    %169 = vector.broadcast %cst_32 : f32 to vector<2x32xf32>
    %170 = arith.addf %169, %168 : vector<2x32xf32>
    %171 = arith.divf %169, %170 : vector<2x32xf32>
    %172 = arith.mulf %163, %146 : vector<2x32xf32>
    %173 = arith.mulf %157, %165 : vector<2x32xf32>
    %174 = arith.addf %172, %173 : vector<2x32xf32>
    %175 = math.tanh %174 : vector<2x32xf32>
    %176 = arith.mulf %171, %175 : vector<2x32xf32>
    %177 = vector.extract_strided_slice %5 {offsets = [12, 0], sizes = [2, 128], strides = [1, 1]} : vector<16x128xf32> to vector<2x128xf32>
    %cst_33 = arith.constant dense<0.000000e+00> : vector<2x128xf32>
    %178 = tpu.matmul %176, %6, %cst_33 {dimension_numbers = #tpu.dot_dimension_numbers<[1], [0], [0], [1], [0, 0, 1, 1], [], []>} : vector<2x32xf32>, vector<32x128xf32>, vector<2x128xf32> -> vector<2x128xf32>
    %179 = arith.addf %177, %178 : vector<2x128xf32>
    %180 = vector.extract_strided_slice %179 {offsets = [0, 0], sizes = [2, 32], strides = [1, 1]} : vector<2x128xf32> to vector<2x32xf32>
    %181 = arith.negf %180 : vector<2x32xf32>
    %182 = math.exp %181 : vector<2x32xf32>
    %cst_34 = arith.constant 1.000000e+00 : f32
    %183 = vector.broadcast %cst_34 : f32 to vector<2x32xf32>
    %184 = arith.addf %183, %182 : vector<2x32xf32>
    %185 = arith.divf %183, %184 : vector<2x32xf32>
    %186 = vector.extract_strided_slice %179 {offsets = [0, 32], sizes = [2, 32], strides = [1, 1]} : vector<2x128xf32> to vector<2x32xf32>
    %187 = arith.negf %186 : vector<2x32xf32>
    %188 = math.exp %187 : vector<2x32xf32>
    %cst_35 = arith.constant 1.000000e+00 : f32
    %189 = vector.broadcast %cst_35 : f32 to vector<2x32xf32>
    %190 = arith.addf %189, %188 : vector<2x32xf32>
    %191 = arith.divf %189, %190 : vector<2x32xf32>
    %192 = vector.extract_strided_slice %179 {offsets = [0, 64], sizes = [2, 32], strides = [1, 1]} : vector<2x128xf32> to vector<2x32xf32>
    %193 = math.tanh %192 : vector<2x32xf32>
    %194 = vector.extract_strided_slice %179 {offsets = [0, 96], sizes = [2, 32], strides = [1, 1]} : vector<2x128xf32> to vector<2x32xf32>
    %195 = arith.negf %194 : vector<2x32xf32>
    %196 = math.exp %195 : vector<2x32xf32>
    %cst_36 = arith.constant 1.000000e+00 : f32
    %197 = vector.broadcast %cst_36 : f32 to vector<2x32xf32>
    %198 = arith.addf %197, %196 : vector<2x32xf32>
    %199 = arith.divf %197, %198 : vector<2x32xf32>
    %200 = arith.mulf %191, %174 : vector<2x32xf32>
    %201 = arith.mulf %185, %193 : vector<2x32xf32>
    %202 = arith.addf %200, %201 : vector<2x32xf32>
    %203 = math.tanh %202 : vector<2x32xf32>
    %204 = arith.mulf %199, %203 : vector<2x32xf32>
    %205 = vector.extract_strided_slice %5 {offsets = [14, 0], sizes = [2, 128], strides = [1, 1]} : vector<16x128xf32> to vector<2x128xf32>
    %cst_37 = arith.constant dense<0.000000e+00> : vector<2x128xf32>
    %206 = tpu.matmul %204, %6, %cst_37 {dimension_numbers = #tpu.dot_dimension_numbers<[1], [0], [0], [1], [0, 0, 1, 1], [], []>} : vector<2x32xf32>, vector<32x128xf32>, vector<2x128xf32> -> vector<2x128xf32>
    %207 = arith.addf %205, %206 : vector<2x128xf32>
    %208 = vector.extract_strided_slice %207 {offsets = [0, 0], sizes = [2, 32], strides = [1, 1]} : vector<2x128xf32> to vector<2x32xf32>
    %209 = arith.negf %208 : vector<2x32xf32>
    %210 = math.exp %209 : vector<2x32xf32>
    %cst_38 = arith.constant 1.000000e+00 : f32
    %211 = vector.broadcast %cst_38 : f32 to vector<2x32xf32>
    %212 = arith.addf %211, %210 : vector<2x32xf32>
    %213 = arith.divf %211, %212 : vector<2x32xf32>
    %214 = vector.extract_strided_slice %207 {offsets = [0, 32], sizes = [2, 32], strides = [1, 1]} : vector<2x128xf32> to vector<2x32xf32>
    %215 = arith.negf %214 : vector<2x32xf32>
    %216 = math.exp %215 : vector<2x32xf32>
    %cst_39 = arith.constant 1.000000e+00 : f32
    %217 = vector.broadcast %cst_39 : f32 to vector<2x32xf32>
    %218 = arith.addf %217, %216 : vector<2x32xf32>
    %219 = arith.divf %217, %218 : vector<2x32xf32>
    %220 = vector.extract_strided_slice %207 {offsets = [0, 64], sizes = [2, 32], strides = [1, 1]} : vector<2x128xf32> to vector<2x32xf32>
    %221 = math.tanh %220 : vector<2x32xf32>
    %222 = vector.extract_strided_slice %207 {offsets = [0, 96], sizes = [2, 32], strides = [1, 1]} : vector<2x128xf32> to vector<2x32xf32>
    %223 = arith.negf %222 : vector<2x32xf32>
    %224 = math.exp %223 : vector<2x32xf32>
    %cst_40 = arith.constant 1.000000e+00 : f32
    %225 = vector.broadcast %cst_40 : f32 to vector<2x32xf32>
    %226 = arith.addf %225, %224 : vector<2x32xf32>
    %227 = arith.divf %225, %226 : vector<2x32xf32>
    %228 = arith.mulf %219, %202 : vector<2x32xf32>
    %229 = arith.mulf %213, %221 : vector<2x32xf32>
    %230 = arith.addf %228, %229 : vector<2x32xf32>
    %231 = math.tanh %230 : vector<2x32xf32>
    %232 = arith.mulf %227, %231 : vector<2x32xf32>
    %233 = tpu.concatenate %36, %64, %92, %120, %148, %176, %204, %232 in 0 : vector<2x32xf32>, vector<2x32xf32>, vector<2x32xf32>, vector<2x32xf32>, vector<2x32xf32>, vector<2x32xf32>, vector<2x32xf32>, vector<2x32xf32> -> vector<16x32xf32>
    %c0_41 = arith.constant 0 : index
    %c0_42 = arith.constant 0 : index
    %234 = vector.load %arg4[%c0_41, %c0_42] : memref<32x128xf32, #tpu.memory_space<vmem>>, vector<32x128xf32>
    %cst_43 = arith.constant dense<0.000000e+00> : vector<16x128xf32>
    %235 = tpu.matmul %233, %234, %cst_43 {dimension_numbers = #tpu.dot_dimension_numbers<[1], [0], [0], [1], [0, 0, 1, 1], [], []>} : vector<16x32xf32>, vector<32x128xf32>, vector<16x128xf32> -> vector<16x128xf32>
    %c0_44 = arith.constant 0 : index
    %c0_45 = arith.constant 0 : index
    %236 = vector.load %arg5[%c0_44, %c0_45] : memref<1x128xf32, #tpu.memory_space<vmem>>, vector<1x128xf32>
    %237 = vector.broadcast %236 : vector<1x128xf32> to vector<16x128xf32>
    %238 = arith.addf %235, %237 : vector<16x128xf32>
    %c0_46 = arith.constant 0 : index
    %c0_47 = arith.constant 0 : index
    %239 = vector.load %arg6[%c0_46, %c0_47] : memref<32x128xf32, #tpu.memory_space<vmem>>, vector<32x128xf32>
    %cst_48 = arith.constant 0.000000e+00 : f32
    %240 = vector.broadcast %cst_48 : f32 to vector<2x32xf32>
    %cst_49 = arith.constant 0.000000e+00 : f32
    %241 = vector.broadcast %cst_49 : f32 to vector<2x32xf32>
    %242 = vector.extract_strided_slice %238 {offsets = [0, 0], sizes = [2, 128], strides = [1, 1]} : vector<16x128xf32> to vector<2x128xf32>
    %cst_50 = arith.constant dense<0.000000e+00> : vector<2x128xf32>
    %243 = tpu.matmul %240, %239, %cst_50 {dimension_numbers = #tpu.dot_dimension_numbers<[1], [0], [0], [1], [0, 0, 1, 1], [], []>} : vector<2x32xf32>, vector<32x128xf32>, vector<2x128xf32> -> vector<2x128xf32>
    %244 = arith.addf %242, %243 : vector<2x128xf32>
    %245 = vector.extract_strided_slice %244 {offsets = [0, 0], sizes = [2, 32], strides = [1, 1]} : vector<2x128xf32> to vector<2x32xf32>
    %246 = arith.negf %245 : vector<2x32xf32>
    %247 = math.exp %246 : vector<2x32xf32>
    %cst_51 = arith.constant 1.000000e+00 : f32
    %248 = vector.broadcast %cst_51 : f32 to vector<2x32xf32>
    %249 = arith.addf %248, %247 : vector<2x32xf32>
    %250 = arith.divf %248, %249 : vector<2x32xf32>
    %251 = vector.extract_strided_slice %244 {offsets = [0, 32], sizes = [2, 32], strides = [1, 1]} : vector<2x128xf32> to vector<2x32xf32>
    %252 = arith.negf %251 : vector<2x32xf32>
    %253 = math.exp %252 : vector<2x32xf32>
    %cst_52 = arith.constant 1.000000e+00 : f32
    %254 = vector.broadcast %cst_52 : f32 to vector<2x32xf32>
    %255 = arith.addf %254, %253 : vector<2x32xf32>
    %256 = arith.divf %254, %255 : vector<2x32xf32>
    %257 = vector.extract_strided_slice %244 {offsets = [0, 64], sizes = [2, 32], strides = [1, 1]} : vector<2x128xf32> to vector<2x32xf32>
    %258 = math.tanh %257 : vector<2x32xf32>
    %259 = vector.extract_strided_slice %244 {offsets = [0, 96], sizes = [2, 32], strides = [1, 1]} : vector<2x128xf32> to vector<2x32xf32>
    %260 = arith.negf %259 : vector<2x32xf32>
    %261 = math.exp %260 : vector<2x32xf32>
    %cst_53 = arith.constant 1.000000e+00 : f32
    %262 = vector.broadcast %cst_53 : f32 to vector<2x32xf32>
    %263 = arith.addf %262, %261 : vector<2x32xf32>
    %264 = arith.divf %262, %263 : vector<2x32xf32>
    %265 = arith.mulf %256, %241 : vector<2x32xf32>
    %266 = arith.mulf %250, %258 : vector<2x32xf32>
    %267 = arith.addf %265, %266 : vector<2x32xf32>
    %268 = math.tanh %267 : vector<2x32xf32>
    %269 = arith.mulf %264, %268 : vector<2x32xf32>
    %270 = vector.extract_strided_slice %238 {offsets = [2, 0], sizes = [2, 128], strides = [1, 1]} : vector<16x128xf32> to vector<2x128xf32>
    %cst_54 = arith.constant dense<0.000000e+00> : vector<2x128xf32>
    %271 = tpu.matmul %269, %239, %cst_54 {dimension_numbers = #tpu.dot_dimension_numbers<[1], [0], [0], [1], [0, 0, 1, 1], [], []>} : vector<2x32xf32>, vector<32x128xf32>, vector<2x128xf32> -> vector<2x128xf32>
    %272 = arith.addf %270, %271 : vector<2x128xf32>
    %273 = vector.extract_strided_slice %272 {offsets = [0, 0], sizes = [2, 32], strides = [1, 1]} : vector<2x128xf32> to vector<2x32xf32>
    %274 = arith.negf %273 : vector<2x32xf32>
    %275 = math.exp %274 : vector<2x32xf32>
    %cst_55 = arith.constant 1.000000e+00 : f32
    %276 = vector.broadcast %cst_55 : f32 to vector<2x32xf32>
    %277 = arith.addf %276, %275 : vector<2x32xf32>
    %278 = arith.divf %276, %277 : vector<2x32xf32>
    %279 = vector.extract_strided_slice %272 {offsets = [0, 32], sizes = [2, 32], strides = [1, 1]} : vector<2x128xf32> to vector<2x32xf32>
    %280 = arith.negf %279 : vector<2x32xf32>
    %281 = math.exp %280 : vector<2x32xf32>
    %cst_56 = arith.constant 1.000000e+00 : f32
    %282 = vector.broadcast %cst_56 : f32 to vector<2x32xf32>
    %283 = arith.addf %282, %281 : vector<2x32xf32>
    %284 = arith.divf %282, %283 : vector<2x32xf32>
    %285 = vector.extract_strided_slice %272 {offsets = [0, 64], sizes = [2, 32], strides = [1, 1]} : vector<2x128xf32> to vector<2x32xf32>
    %286 = math.tanh %285 : vector<2x32xf32>
    %287 = vector.extract_strided_slice %272 {offsets = [0, 96], sizes = [2, 32], strides = [1, 1]} : vector<2x128xf32> to vector<2x32xf32>
    %288 = arith.negf %287 : vector<2x32xf32>
    %289 = math.exp %288 : vector<2x32xf32>
    %cst_57 = arith.constant 1.000000e+00 : f32
    %290 = vector.broadcast %cst_57 : f32 to vector<2x32xf32>
    %291 = arith.addf %290, %289 : vector<2x32xf32>
    %292 = arith.divf %290, %291 : vector<2x32xf32>
    %293 = arith.mulf %284, %267 : vector<2x32xf32>
    %294 = arith.mulf %278, %286 : vector<2x32xf32>
    %295 = arith.addf %293, %294 : vector<2x32xf32>
    %296 = math.tanh %295 : vector<2x32xf32>
    %297 = arith.mulf %292, %296 : vector<2x32xf32>
    %298 = vector.extract_strided_slice %238 {offsets = [4, 0], sizes = [2, 128], strides = [1, 1]} : vector<16x128xf32> to vector<2x128xf32>
    %cst_58 = arith.constant dense<0.000000e+00> : vector<2x128xf32>
    %299 = tpu.matmul %297, %239, %cst_58 {dimension_numbers = #tpu.dot_dimension_numbers<[1], [0], [0], [1], [0, 0, 1, 1], [], []>} : vector<2x32xf32>, vector<32x128xf32>, vector<2x128xf32> -> vector<2x128xf32>
    %300 = arith.addf %298, %299 : vector<2x128xf32>
    %301 = vector.extract_strided_slice %300 {offsets = [0, 0], sizes = [2, 32], strides = [1, 1]} : vector<2x128xf32> to vector<2x32xf32>
    %302 = arith.negf %301 : vector<2x32xf32>
    %303 = math.exp %302 : vector<2x32xf32>
    %cst_59 = arith.constant 1.000000e+00 : f32
    %304 = vector.broadcast %cst_59 : f32 to vector<2x32xf32>
    %305 = arith.addf %304, %303 : vector<2x32xf32>
    %306 = arith.divf %304, %305 : vector<2x32xf32>
    %307 = vector.extract_strided_slice %300 {offsets = [0, 32], sizes = [2, 32], strides = [1, 1]} : vector<2x128xf32> to vector<2x32xf32>
    %308 = arith.negf %307 : vector<2x32xf32>
    %309 = math.exp %308 : vector<2x32xf32>
    %cst_60 = arith.constant 1.000000e+00 : f32
    %310 = vector.broadcast %cst_60 : f32 to vector<2x32xf32>
    %311 = arith.addf %310, %309 : vector<2x32xf32>
    %312 = arith.divf %310, %311 : vector<2x32xf32>
    %313 = vector.extract_strided_slice %300 {offsets = [0, 64], sizes = [2, 32], strides = [1, 1]} : vector<2x128xf32> to vector<2x32xf32>
    %314 = math.tanh %313 : vector<2x32xf32>
    %315 = vector.extract_strided_slice %300 {offsets = [0, 96], sizes = [2, 32], strides = [1, 1]} : vector<2x128xf32> to vector<2x32xf32>
    %316 = arith.negf %315 : vector<2x32xf32>
    %317 = math.exp %316 : vector<2x32xf32>
    %cst_61 = arith.constant 1.000000e+00 : f32
    %318 = vector.broadcast %cst_61 : f32 to vector<2x32xf32>
    %319 = arith.addf %318, %317 : vector<2x32xf32>
    %320 = arith.divf %318, %319 : vector<2x32xf32>
    %321 = arith.mulf %312, %295 : vector<2x32xf32>
    %322 = arith.mulf %306, %314 : vector<2x32xf32>
    %323 = arith.addf %321, %322 : vector<2x32xf32>
    %324 = math.tanh %323 : vector<2x32xf32>
    %325 = arith.mulf %320, %324 : vector<2x32xf32>
    %326 = vector.extract_strided_slice %238 {offsets = [6, 0], sizes = [2, 128], strides = [1, 1]} : vector<16x128xf32> to vector<2x128xf32>
    %cst_62 = arith.constant dense<0.000000e+00> : vector<2x128xf32>
    %327 = tpu.matmul %325, %239, %cst_62 {dimension_numbers = #tpu.dot_dimension_numbers<[1], [0], [0], [1], [0, 0, 1, 1], [], []>} : vector<2x32xf32>, vector<32x128xf32>, vector<2x128xf32> -> vector<2x128xf32>
    %328 = arith.addf %326, %327 : vector<2x128xf32>
    %329 = vector.extract_strided_slice %328 {offsets = [0, 0], sizes = [2, 32], strides = [1, 1]} : vector<2x128xf32> to vector<2x32xf32>
    %330 = arith.negf %329 : vector<2x32xf32>
    %331 = math.exp %330 : vector<2x32xf32>
    %cst_63 = arith.constant 1.000000e+00 : f32
    %332 = vector.broadcast %cst_63 : f32 to vector<2x32xf32>
    %333 = arith.addf %332, %331 : vector<2x32xf32>
    %334 = arith.divf %332, %333 : vector<2x32xf32>
    %335 = vector.extract_strided_slice %328 {offsets = [0, 32], sizes = [2, 32], strides = [1, 1]} : vector<2x128xf32> to vector<2x32xf32>
    %336 = arith.negf %335 : vector<2x32xf32>
    %337 = math.exp %336 : vector<2x32xf32>
    %cst_64 = arith.constant 1.000000e+00 : f32
    %338 = vector.broadcast %cst_64 : f32 to vector<2x32xf32>
    %339 = arith.addf %338, %337 : vector<2x32xf32>
    %340 = arith.divf %338, %339 : vector<2x32xf32>
    %341 = vector.extract_strided_slice %328 {offsets = [0, 64], sizes = [2, 32], strides = [1, 1]} : vector<2x128xf32> to vector<2x32xf32>
    %342 = math.tanh %341 : vector<2x32xf32>
    %343 = vector.extract_strided_slice %328 {offsets = [0, 96], sizes = [2, 32], strides = [1, 1]} : vector<2x128xf32> to vector<2x32xf32>
    %344 = arith.negf %343 : vector<2x32xf32>
    %345 = math.exp %344 : vector<2x32xf32>
    %cst_65 = arith.constant 1.000000e+00 : f32
    %346 = vector.broadcast %cst_65 : f32 to vector<2x32xf32>
    %347 = arith.addf %346, %345 : vector<2x32xf32>
    %348 = arith.divf %346, %347 : vector<2x32xf32>
    %349 = arith.mulf %340, %323 : vector<2x32xf32>
    %350 = arith.mulf %334, %342 : vector<2x32xf32>
    %351 = arith.addf %349, %350 : vector<2x32xf32>
    %352 = math.tanh %351 : vector<2x32xf32>
    %353 = arith.mulf %348, %352 : vector<2x32xf32>
    %354 = vector.extract_strided_slice %238 {offsets = [8, 0], sizes = [2, 128], strides = [1, 1]} : vector<16x128xf32> to vector<2x128xf32>
    %cst_66 = arith.constant dense<0.000000e+00> : vector<2x128xf32>
    %355 = tpu.matmul %353, %239, %cst_66 {dimension_numbers = #tpu.dot_dimension_numbers<[1], [0], [0], [1], [0, 0, 1, 1], [], []>} : vector<2x32xf32>, vector<32x128xf32>, vector<2x128xf32> -> vector<2x128xf32>
    %356 = arith.addf %354, %355 : vector<2x128xf32>
    %357 = vector.extract_strided_slice %356 {offsets = [0, 0], sizes = [2, 32], strides = [1, 1]} : vector<2x128xf32> to vector<2x32xf32>
    %358 = arith.negf %357 : vector<2x32xf32>
    %359 = math.exp %358 : vector<2x32xf32>
    %cst_67 = arith.constant 1.000000e+00 : f32
    %360 = vector.broadcast %cst_67 : f32 to vector<2x32xf32>
    %361 = arith.addf %360, %359 : vector<2x32xf32>
    %362 = arith.divf %360, %361 : vector<2x32xf32>
    %363 = vector.extract_strided_slice %356 {offsets = [0, 32], sizes = [2, 32], strides = [1, 1]} : vector<2x128xf32> to vector<2x32xf32>
    %364 = arith.negf %363 : vector<2x32xf32>
    %365 = math.exp %364 : vector<2x32xf32>
    %cst_68 = arith.constant 1.000000e+00 : f32
    %366 = vector.broadcast %cst_68 : f32 to vector<2x32xf32>
    %367 = arith.addf %366, %365 : vector<2x32xf32>
    %368 = arith.divf %366, %367 : vector<2x32xf32>
    %369 = vector.extract_strided_slice %356 {offsets = [0, 64], sizes = [2, 32], strides = [1, 1]} : vector<2x128xf32> to vector<2x32xf32>
    %370 = math.tanh %369 : vector<2x32xf32>
    %371 = vector.extract_strided_slice %356 {offsets = [0, 96], sizes = [2, 32], strides = [1, 1]} : vector<2x128xf32> to vector<2x32xf32>
    %372 = arith.negf %371 : vector<2x32xf32>
    %373 = math.exp %372 : vector<2x32xf32>
    %cst_69 = arith.constant 1.000000e+00 : f32
    %374 = vector.broadcast %cst_69 : f32 to vector<2x32xf32>
    %375 = arith.addf %374, %373 : vector<2x32xf32>
    %376 = arith.divf %374, %375 : vector<2x32xf32>
    %377 = arith.mulf %368, %351 : vector<2x32xf32>
    %378 = arith.mulf %362, %370 : vector<2x32xf32>
    %379 = arith.addf %377, %378 : vector<2x32xf32>
    %380 = math.tanh %379 : vector<2x32xf32>
    %381 = arith.mulf %376, %380 : vector<2x32xf32>
    %382 = vector.extract_strided_slice %238 {offsets = [10, 0], sizes = [2, 128], strides = [1, 1]} : vector<16x128xf32> to vector<2x128xf32>
    %cst_70 = arith.constant dense<0.000000e+00> : vector<2x128xf32>
    %383 = tpu.matmul %381, %239, %cst_70 {dimension_numbers = #tpu.dot_dimension_numbers<[1], [0], [0], [1], [0, 0, 1, 1], [], []>} : vector<2x32xf32>, vector<32x128xf32>, vector<2x128xf32> -> vector<2x128xf32>
    %384 = arith.addf %382, %383 : vector<2x128xf32>
    %385 = vector.extract_strided_slice %384 {offsets = [0, 0], sizes = [2, 32], strides = [1, 1]} : vector<2x128xf32> to vector<2x32xf32>
    %386 = arith.negf %385 : vector<2x32xf32>
    %387 = math.exp %386 : vector<2x32xf32>
    %cst_71 = arith.constant 1.000000e+00 : f32
    %388 = vector.broadcast %cst_71 : f32 to vector<2x32xf32>
    %389 = arith.addf %388, %387 : vector<2x32xf32>
    %390 = arith.divf %388, %389 : vector<2x32xf32>
    %391 = vector.extract_strided_slice %384 {offsets = [0, 32], sizes = [2, 32], strides = [1, 1]} : vector<2x128xf32> to vector<2x32xf32>
    %392 = arith.negf %391 : vector<2x32xf32>
    %393 = math.exp %392 : vector<2x32xf32>
    %cst_72 = arith.constant 1.000000e+00 : f32
    %394 = vector.broadcast %cst_72 : f32 to vector<2x32xf32>
    %395 = arith.addf %394, %393 : vector<2x32xf32>
    %396 = arith.divf %394, %395 : vector<2x32xf32>
    %397 = vector.extract_strided_slice %384 {offsets = [0, 64], sizes = [2, 32], strides = [1, 1]} : vector<2x128xf32> to vector<2x32xf32>
    %398 = math.tanh %397 : vector<2x32xf32>
    %399 = vector.extract_strided_slice %384 {offsets = [0, 96], sizes = [2, 32], strides = [1, 1]} : vector<2x128xf32> to vector<2x32xf32>
    %400 = arith.negf %399 : vector<2x32xf32>
    %401 = math.exp %400 : vector<2x32xf32>
    %cst_73 = arith.constant 1.000000e+00 : f32
    %402 = vector.broadcast %cst_73 : f32 to vector<2x32xf32>
    %403 = arith.addf %402, %401 : vector<2x32xf32>
    %404 = arith.divf %402, %403 : vector<2x32xf32>
    %405 = arith.mulf %396, %379 : vector<2x32xf32>
    %406 = arith.mulf %390, %398 : vector<2x32xf32>
    %407 = arith.addf %405, %406 : vector<2x32xf32>
    %408 = math.tanh %407 : vector<2x32xf32>
    %409 = arith.mulf %404, %408 : vector<2x32xf32>
    %410 = vector.extract_strided_slice %238 {offsets = [12, 0], sizes = [2, 128], strides = [1, 1]} : vector<16x128xf32> to vector<2x128xf32>
    %cst_74 = arith.constant dense<0.000000e+00> : vector<2x128xf32>
    %411 = tpu.matmul %409, %239, %cst_74 {dimension_numbers = #tpu.dot_dimension_numbers<[1], [0], [0], [1], [0, 0, 1, 1], [], []>} : vector<2x32xf32>, vector<32x128xf32>, vector<2x128xf32> -> vector<2x128xf32>
    %412 = arith.addf %410, %411 : vector<2x128xf32>
    %413 = vector.extract_strided_slice %412 {offsets = [0, 0], sizes = [2, 32], strides = [1, 1]} : vector<2x128xf32> to vector<2x32xf32>
    %414 = arith.negf %413 : vector<2x32xf32>
    %415 = math.exp %414 : vector<2x32xf32>
    %cst_75 = arith.constant 1.000000e+00 : f32
    %416 = vector.broadcast %cst_75 : f32 to vector<2x32xf32>
    %417 = arith.addf %416, %415 : vector<2x32xf32>
    %418 = arith.divf %416, %417 : vector<2x32xf32>
    %419 = vector.extract_strided_slice %412 {offsets = [0, 32], sizes = [2, 32], strides = [1, 1]} : vector<2x128xf32> to vector<2x32xf32>
    %420 = arith.negf %419 : vector<2x32xf32>
    %421 = math.exp %420 : vector<2x32xf32>
    %cst_76 = arith.constant 1.000000e+00 : f32
    %422 = vector.broadcast %cst_76 : f32 to vector<2x32xf32>
    %423 = arith.addf %422, %421 : vector<2x32xf32>
    %424 = arith.divf %422, %423 : vector<2x32xf32>
    %425 = vector.extract_strided_slice %412 {offsets = [0, 64], sizes = [2, 32], strides = [1, 1]} : vector<2x128xf32> to vector<2x32xf32>
    %426 = math.tanh %425 : vector<2x32xf32>
    %427 = vector.extract_strided_slice %412 {offsets = [0, 96], sizes = [2, 32], strides = [1, 1]} : vector<2x128xf32> to vector<2x32xf32>
    %428 = arith.negf %427 : vector<2x32xf32>
    %429 = math.exp %428 : vector<2x32xf32>
    %cst_77 = arith.constant 1.000000e+00 : f32
    %430 = vector.broadcast %cst_77 : f32 to vector<2x32xf32>
    %431 = arith.addf %430, %429 : vector<2x32xf32>
    %432 = arith.divf %430, %431 : vector<2x32xf32>
    %433 = arith.mulf %424, %407 : vector<2x32xf32>
    %434 = arith.mulf %418, %426 : vector<2x32xf32>
    %435 = arith.addf %433, %434 : vector<2x32xf32>
    %436 = math.tanh %435 : vector<2x32xf32>
    %437 = arith.mulf %432, %436 : vector<2x32xf32>
    %438 = vector.extract_strided_slice %238 {offsets = [14, 0], sizes = [2, 128], strides = [1, 1]} : vector<16x128xf32> to vector<2x128xf32>
    %cst_78 = arith.constant dense<0.000000e+00> : vector<2x128xf32>
    %439 = tpu.matmul %437, %239, %cst_78 {dimension_numbers = #tpu.dot_dimension_numbers<[1], [0], [0], [1], [0, 0, 1, 1], [], []>} : vector<2x32xf32>, vector<32x128xf32>, vector<2x128xf32> -> vector<2x128xf32>
    %440 = arith.addf %438, %439 : vector<2x128xf32>
    %441 = vector.extract_strided_slice %440 {offsets = [0, 0], sizes = [2, 32], strides = [1, 1]} : vector<2x128xf32> to vector<2x32xf32>
    %442 = arith.negf %441 : vector<2x32xf32>
    %443 = math.exp %442 : vector<2x32xf32>
    %cst_79 = arith.constant 1.000000e+00 : f32
    %444 = vector.broadcast %cst_79 : f32 to vector<2x32xf32>
    %445 = arith.addf %444, %443 : vector<2x32xf32>
    %446 = arith.divf %444, %445 : vector<2x32xf32>
    %447 = vector.extract_strided_slice %440 {offsets = [0, 32], sizes = [2, 32], strides = [1, 1]} : vector<2x128xf32> to vector<2x32xf32>
    %448 = arith.negf %447 : vector<2x32xf32>
    %449 = math.exp %448 : vector<2x32xf32>
    %cst_80 = arith.constant 1.000000e+00 : f32
    %450 = vector.broadcast %cst_80 : f32 to vector<2x32xf32>
    %451 = arith.addf %450, %449 : vector<2x32xf32>
    %452 = arith.divf %450, %451 : vector<2x32xf32>
    %453 = vector.extract_strided_slice %440 {offsets = [0, 64], sizes = [2, 32], strides = [1, 1]} : vector<2x128xf32> to vector<2x32xf32>
    %454 = math.tanh %453 : vector<2x32xf32>
    %455 = vector.extract_strided_slice %440 {offsets = [0, 96], sizes = [2, 32], strides = [1, 1]} : vector<2x128xf32> to vector<2x32xf32>
    %456 = arith.negf %455 : vector<2x32xf32>
    %457 = math.exp %456 : vector<2x32xf32>
    %cst_81 = arith.constant 1.000000e+00 : f32
    %458 = vector.broadcast %cst_81 : f32 to vector<2x32xf32>
    %459 = arith.addf %458, %457 : vector<2x32xf32>
    %460 = arith.divf %458, %459 : vector<2x32xf32>
    %461 = arith.mulf %452, %435 : vector<2x32xf32>
    %462 = arith.mulf %446, %454 : vector<2x32xf32>
    %463 = arith.addf %461, %462 : vector<2x32xf32>
    %464 = math.tanh %463 : vector<2x32xf32>
    %465 = arith.mulf %460, %464 : vector<2x32xf32>
    %c0_82 = arith.constant 0 : index
    %c0_83 = arith.constant 0 : index
    %466 = vector.load %arg7[%c0_82, %c0_83] : memref<32x4xf32, #tpu.memory_space<vmem>>, vector<32x4xf32>
    %cst_84 = arith.constant dense<0.000000e+00> : vector<2x4xf32>
    %467 = tpu.matmul %465, %466, %cst_84 {dimension_numbers = #tpu.dot_dimension_numbers<[1], [0], [0], [1], [0, 0, 1, 1], [], []>} : vector<2x32xf32>, vector<32x4xf32>, vector<2x4xf32> -> vector<2x4xf32>
    %c0_85 = arith.constant 0 : index
    %c0_86 = arith.constant 0 : index
    %468 = vector.load %arg8[%c0_85, %c0_86] : memref<1x4xf32, #tpu.memory_space<vmem>>, vector<1x4xf32>
    %469 = vector.broadcast %468 : vector<1x4xf32> to vector<2x4xf32>
    %470 = arith.addf %467, %469 : vector<2x4xf32>
    %c0_87 = arith.constant 0 : index
    %c0_88 = arith.constant 0 : index
    %471 = vector.load %arg9[%c0_87, %c0_88] : memref<2x4xf32, #tpu.memory_space<vmem>>, vector<2x4xf32>
    tpu.vector_store %arg9[%c0_87, %c0_88], %470 {strides = array<i32>} : memref<2x4xf32, #tpu.memory_space<vmem>>, vector<2x4xf32>,
    return
  }
}

</mosaic_0001>

<llo_original>
// kernel: lstm_decoder_forward.1
$region0: #{lstm_decoder_forward.1}
  #allocation0 [shape = 'u32[]', space=smem, size = 0x4, offset = 0x4, fixed_abs, tag = 'smem constant byte address 0x4 - core index']
  #allocation1 [shape = 'u32[72,128]{1,0:T(1,128)}', space=vmem, size = 0x9000, scoped, tag = 'internal scratch']
  %s0 = inlined_call_operand.vmem [shape: f32[16,4], index: 0, kind: input, shape index: {}]
  %s1 = inlined_call_operand.vmem [shape: f32[4,128], index: 1, kind: input, shape index: {}]
  %s2 = inlined_call_operand.vmem [shape: f32[1,128], index: 2, kind: input, shape index: {}]
  %s3 = inlined_call_operand.vmem [shape: f32[32,128], index: 3, kind: input, shape index: {}]
  %s4 = inlined_call_operand.hbm [shape: f32[32,128], index: 4, kind: input, shape index: {}]
  %s5 = inlined_call_operand.vmem [shape: f32[1,128], index: 5, kind: input, shape index: {}]
  %s6 = inlined_call_operand.hbm [shape: f32[32,128], index: 6, kind: input, shape index: {}]
  %s7 = inlined_call_operand.vmem [shape: f32[32,4], index: 7, kind: input, shape index: {}]
  %s8 = inlined_call_operand.vmem [shape: f32[1,4], index: 8, kind: input, shape index: {}]
  %s9 = inlined_call_operand.hbm [shape: f32[2,4], index: 9, kind: output, shape index: {}]
  %s10 = sld [smem:[#allocation0]]
  $region54: #{lstm_decoder_forward.1} parent=0
    _
  %s12 = ssub.s32 1, %s10
  %s13 = scalar_select 0, %s12, %s10
  $region1: #{lstm_decoder_forward.1} parent=0
    #allocation2 [shape = 'u8[16384]{0}', space=vmem, size = 0x4000, scoped, tag = 'input window, operand 4, single buffered']
    #allocation3 [shape = 's32[1]{0}', space=sflag, size = 0x4, scoped, tag = 'scoped memory for lstm_decoder_forward.1']
    #allocation4 [shape = 's32[1]{0}', space=sflag, size = 0x4, scoped, tag = 'scoped memory for lstm_decoder_forward.1']
    #allocation5 [shape = 'u8[16384]{0}', space=vmem, size = 0x4000, scoped, tag = 'input window, operand 6, single buffered']
    #allocation6 [shape = 's32[1]{0}', space=sflag, size = 0x4, scoped, tag = 'scoped memory for lstm_decoder_forward.1']
    #allocation7 [shape = 'u8[1024]{0}', space=vmem, size = 0x400, scoped, tag = 'output window, operand 0, single buffered']
    %14 = vsyncpa [#allocation3], 0
    %15 = vsyncpa [#allocation6], 0
    %16 = vsyncpa [#allocation4], 0
    // Predicated region
    $region2: #{lstm_decoder_forward.1} parent=1 // pred_check
      _
    $region3: #{lstm_decoder_forward.1} parent=1 // pred_check_branch
      %18 = sbr.rel (0) target = $region5
    $region4: #{lstm_decoder_forward.1} parent=1 // pred_region
      _
    $region5: #{lstm_decoder_forward.1} parent=1 // pred_fallthru
      _
    // Predicated region
    $region6: #{lstm_decoder_forward.1} parent=1 // pred_check
      _
    $region7: #{lstm_decoder_forward.1} parent=1 // pred_check_branch
      %20 = sbr.rel (0) target = $region9
    $region8: #{lstm_decoder_forward.1} parent=1 // pred_region
      _
    $region9: #{lstm_decoder_forward.1} parent=1 // pred_fallthru
      _
    // Predicated region
    $region10: #{lstm_decoder_forward.1} parent=1 // pred_check
      _
    $region11: #{lstm_decoder_forward.1} parent=1 // pred_check_branch
      %22 = sbr.rel (0) target = $region13
    $region12: #{lstm_decoder_forward.1} parent=1 // pred_region
      _
    $region13: #{lstm_decoder_forward.1} parent=1 // pred_fallthru
      _
    // Predicated region
    $region14: #{lstm_decoder_forward.1} parent=1 // pred_check
      _
    $region15: #{lstm_decoder_forward.1} parent=1 // pred_check_branch
      %24 = sbr.rel (0) target = $region17
    $region16: #{lstm_decoder_forward.1} parent=1 // pred_region
      _
    $region17: #{lstm_decoder_forward.1} parent=1 // pred_fallthru
      _
    // Predicated region
    $region18: #{lstm_decoder_forward.1} parent=1 // pred_check
      _
    $region19: #{lstm_decoder_forward.1} parent=1 // pred_check_branch
      %26 = sbr.rel (0) target = $region21
    $region20: #{lstm_decoder_forward.1} parent=1 // pred_region
      %28 = vsyncadd [#allocation3], 0
      %s29 = sshll.u32 %s4, 4
      %s30 = int_to_ptr.hbm [resolvable:$true] %s29
      %s31 = sshll.u32 [#allocation2], 4
      %s32 = int_to_ptr.vmem [resolvable:$true] %s31
      %37 = dma.hbm_to_vmem [thread:$0]  %s30, 512, %s32, [#allocation3], 128, 128, 8
    $region21: #{lstm_decoder_forward.1} parent=1 // pred_fallthru
      _
    // Predicated region
    $region22: #{lstm_decoder_forward.1} parent=1 // pred_check
      _
    $region23: #{lstm_decoder_forward.1} parent=1 // pred_check_branch
      %39 = sbr.rel (0) target = $region25
    $region24: #{lstm_decoder_forward.1} parent=1 // pred_region
      _
    $region25: #{lstm_decoder_forward.1} parent=1 // pred_fallthru
      _
    // Predicated region
    $region26: #{lstm_decoder_forward.1} parent=1 // pred_check
      _
    $region27: #{lstm_decoder_forward.1} parent=1 // pred_check_branch
      %41 = sbr.rel (0) target = $region29
    $region28: #{lstm_decoder_forward.1} parent=1 // pred_region
      %43 = vsyncadd [#allocation6], 0
      %s44 = sshll.u32 %s6, 4
      %s45 = int_to_ptr.hbm [resolvable:$true] %s44
      %s46 = sshll.u32 [#allocation5], 4
      %s47 = int_to_ptr.vmem [resolvable:$true] %s46
      %52 = dma.hbm_to_vmem [thread:$0]  %s45, 512, %s47, [#allocation6], 128, 128, 8
    $region29: #{lstm_decoder_forward.1} parent=1 // pred_fallthru
      _
    // Predicated region
    $region30: #{lstm_decoder_forward.1} parent=1 // pred_check
      _
    $region31: #{lstm_decoder_forward.1} parent=1 // pred_check_branch
      %54 = sbr.rel (0) target = $region33
    $region32: #{lstm_decoder_forward.1} parent=1 // pred_region
      _
    $region33: #{lstm_decoder_forward.1} parent=1 // pred_fallthru
      _
    // Predicated region
    $region34: #{lstm_decoder_forward.1} parent=1 // pred_check
      _
    $region35: #{lstm_decoder_forward.1} parent=1 // pred_check_branch
      %56 = sbr.rel (0) target = $region37
    $region36: #{lstm_decoder_forward.1} parent=1 // pred_region
      _
    $region37: #{lstm_decoder_forward.1} parent=1 // pred_fallthru
      _
    // Predicated region
    $region38: #{lstm_decoder_forward.1} parent=1 // pred_check
      _
    $region39: #{lstm_decoder_forward.1} parent=1 // pred_check_branch
      %58 = sbr.rel (0) target = $region41
    $region40: #{lstm_decoder_forward.1} parent=1 // pred_region
      %60 = dma.done [#allocation3], 512
    $region41: #{lstm_decoder_forward.1} parent=1 // pred_fallthru
      _
    // Predicated region
    $region42: #{lstm_decoder_forward.1} parent=1 // pred_check
      _
    $region43: #{lstm_decoder_forward.1} parent=1 // pred_check_branch
      %62 = sbr.rel (0) target = $region45
    $region44: #{lstm_decoder_forward.1} parent=1 // pred_region
      %64 = dma.done [#allocation6], 512
    $region45: #{lstm_decoder_forward.1} parent=1 // pred_fallthru
      _
    %v65 = vld [vmem:[%s0] sm:$0xff]
    %v66 = vld [vmem:[%s0 + $0x8] sm:$0xff]
    %v67 = vld [vmem:[%s1] sm:$0xf]
    %v68 = vld [vmem:[%s2] sm:$0x1]
    %v70 = vperm.slane %v68, 0
    %vm72 = vcmask 31744
    %v74 = vsel %vm72, %v65, 0
    %v77 = vsel %vm72, %v66, 0
    %vm79 = vcmask 1043456
    %v81 = vsel %vm79, %v67, 0
    %83 = vmatpush.msra.mxu0 0.0
    %84 = vmatpush.msra.mxu0 0.0
    %85 = vmatpush.msra.mxu0 0.0
    %86 = vmatpush.msra.mxu0 0.0
    %87 = vmatpush.msra.mxu0 0.0
    %88 = vmatpush.msra.mxu0 0.0
    %89 = vmatpush.msra.mxu0 0.0
    %90 = vmatpush.msra.mxu0 0.0
    %91 = vmatpush.msra.mxu0 0.0
    %92 = vmatpush.msra.mxu0 0.0
    %93 = vmatpush.msra.mxu0 0.0
    %94 = vmatpush.msra.mxu0 0.0
    %95 = vmatpush.msra.mxu0 0.0
    %96 = vmatpush.msra.mxu0 0.0
    %97 = vmatpush.msra.mxu0 0.0
    %98 = vmatpush.msra.mxu0 %v81
    %99 = vmatmul.f32.gmra.mxu0 %v74
    %v100 = vpop.f32.mrf.mxu0
    %v101 = vadd.f32 %v70, %v100
    %102 = vmatmul.f32.gmra.mxu0 %v77
    %v103 = vpop.f32.mrf.mxu0
    %v104 = vadd.f32 %v70, %v103
    %105 = vdwg.mxu0
    %v106 = vld [vmem:[%s3] sm:$0xff]
    %v107 = vld [vmem:[%s3 + $0x8] sm:$0xff]
    %v108 = vld [vmem:[%s3 + $0x10] sm:$0xff]
    %v109 = vld [vmem:[%s3 + $0x18] sm:$0xff]
    %vm110 = vcmask 261120
    %v112 = vsel %vm110, 0.0, 0
    %114 = vmatpush.msra.mxu0 0.0
    %115 = vmatpush.msra.mxu0 0.0
    %116 = vmatpush.msra.mxu0 0.0
    %117 = vmatpush.msra.mxu0 0.0
    %118 = vmatpush.msra.mxu0 0.0
    %119 = vmatpush.msra.mxu0 0.0
    %120 = vmatpush.msra.mxu0 0.0
    %121 = vmatpush.msra.mxu0 0.0
    %122 = vmatpush.msra.mxu0 0.0
    %123 = vmatpush.msra.mxu0 0.0
    %124 = vmatpush.msra.mxu0 0.0
    %125 = vmatpush.msra.mxu0 0.0
    %126 = vmatpush.msra.mxu0 %v109
    %127 = vmatpush.msra.mxu0 %v108
    %128 = vmatpush.msra.mxu0 %v107
    %129 = vmatpush.msra.mxu0 %v106
    %130 = vmatmul.f32.gmra.mxu0 %v112
    %v131 = vpop.f32.mrf.mxu0
    %v132 = vadd.f32 0.0, %v131
    %133 = vdwg.mxu0
    %v134 = vadd.f32 %v101, %v132
    %v135 = vxor.u32 %v134, 2147483648
    %v136 = vmul.f32 %v135, 1.442695
    %v137 = vpow.pop %v136
    %v138 = vadd.f32 %v137, 1.0
    %v139 = vrcp.pop %v138
    %v140 = vmul.f32 %v138, %v139
    %v141 = vsub.f32 1.0, %v140
    %v142 = vmul.f32 %v139, %v141
    %v143 = vadd.f32 %v139, %v142
    %vm144 = vweird.f32 %v138
    %vm145 = vweird.f32 %v139
    %vm146 = vmor %vm144, %vm145
    %v147 = vsel %vm146, %v139, %v143
    %v148 = vand.u32 2147483647, %v138
    %vm149 = vcmp.eq.f32.partialorder %v148, 8.507059e+37
    %v150 = vand.u32 %v138, 2147483648
    %v151 = vor.u32 1.1754944e-38, %v150
    %v152 = vsel %vm149, %v151, %v147
    %v153 = vmul.f32 1.0, %v152
    %v154 = vtanh.pop %v134
    %v155 = vmul.f32 %v153, 0.0
    %157 = vrot.lane.b32.xlu0 %v154, 64
    %v158 = vpop.permute.xlu0 %157
    %v160 = vmul.f32 %v153, %v158
    %162 = vrot.lane.b32.xlu0 %v160, 32
    %v163 = vpop.permute.xlu0 %162
    %v165 = vadd.f32 %v155, %v163
    %v166 = vtanh.pop %v165
    %168 = vrot.lane.b32.xlu0 %v166, 64
    %v169 = vpop.permute.xlu0 %168
    %v171 = vmul.f32 %v153, %v169
    %173 = vrot.lane.b32.xlu0 %v171, 32
    %v174 = vpop.permute.xlu0 %173
    %v175 = vsel %vm110, %v174, 0
    %177 = vmatpush.msra.mxu0 0.0
    %178 = vmatpush.msra.mxu0 0.0
    %179 = vmatpush.msra.mxu0 0.0
    %180 = vmatpush.msra.mxu0 0.0
    %181 = vmatpush.msra.mxu0 0.0
    %182 = vmatpush.msra.mxu0 0.0
    %183 = vmatpush.msra.mxu0 0.0
    %184 = vmatpush.msra.mxu0 0.0
    %185 = vmatpush.msra.mxu0 0.0
    %186 = vmatpush.msra.mxu0 0.0
    %187 = vmatpush.msra.mxu0 0.0
    %188 = vmatpush.msra.mxu0 0.0
    %189 = vmatpush.msra.mxu0 %v109
    %190 = vmatpush.msra.mxu0 %v108
    %191 = vmatpush.msra.mxu0 %v107
    %192 = vmatpush.msra.mxu0 %v106
    %193 = vmatmul.f32.gmra.mxu0 %v175
    %v194 = vpop.f32.mrf.mxu0
    %v195 = vadd.f32 0.0, %v194
    %196 = vdwg.mxu0
    %v198 = vrot.slane %v195, 6
    %v200 = vadd.f32 %v101, %v198
    %v201 = vxor.u32 %v200, 2147483648
    %v202 = vmul.f32 %v201, 1.442695
    %v203 = vpow.pop %v202
    %v204 = vadd.f32 %v203, 1.0
    %v205 = vrcp.pop %v204
    %v206 = vmul.f32 %v204, %v205
    %v207 = vsub.f32 1.0, %v206
    %v208 = vmul.f32 %v205, %v207
    %v209 = vadd.f32 %v205, %v208
    %vm210 = vweird.f32 %v204
    %vm211 = vweird.f32 %v205
    %vm212 = vmor %vm210, %vm211
    %v213 = vsel %vm212, %v205, %v209
    %v214 = vand.u32 2147483647, %v204
    %vm215 = vcmp.eq.f32.partialorder %v214, 8.507059e+37
    %v216 = vand.u32 %v204, 2147483648
    %v217 = vor.u32 1.1754944e-38, %v216
    %v218 = vsel %vm215, %v217, %v213
    %v219 = vmul.f32 1.0, %v218
    %v220 = vtanh.pop %v200
    %v222 = vrot.slane %v165, 6
    %v224 = vmul.f32 %v219, %v222
    %226 = vrot.lane.b32.xlu0 %v220, 64
    %v227 = vpop.permute.xlu0 %226
    %v229 = vmul.f32 %v219, %v227
    %231 = vrot.lane.b32.xlu0 %v229, 32
    %v232 = vpop.permute.xlu0 %231
    %v234 = vadd.f32 %v224, %v232
    %v235 = vtanh.pop %v234
    %237 = vrot.lane.b32.xlu0 %v235, 64
    %v238 = vpop.permute.xlu0 %237
    %v240 = vmul.f32 %v219, %v238
    %v242 = vrot.slane %v240, 2
    %243 = vrot.lane.b32.xlu0 %v242, 32
    %v244 = vpop.permute.xlu0 %243
    %v245 = vsel %vm110, %v244, 0
    %247 = vmatpush.msra.mxu0 0.0
    %248 = vmatpush.msra.mxu0 0.0
    %249 = vmatpush.msra.mxu0 0.0
    %250 = vmatpush.msra.mxu0 0.0
    %251 = vmatpush.msra.mxu0 0.0
    %252 = vmatpush.msra.mxu0 0.0
    %253 = vmatpush.msra.mxu0 0.0
    %254 = vmatpush.msra.mxu0 0.0
    %255 = vmatpush.msra.mxu0 0.0
    %256 = vmatpush.msra.mxu0 0.0
    %257 = vmatpush.msra.mxu0 0.0
    %258 = vmatpush.msra.mxu0 0.0
    %259 = vmatpush.msra.mxu0 %v109
    %260 = vmatpush.msra.mxu0 %v108
    %261 = vmatpush.msra.mxu0 %v107
    %262 = vmatpush.msra.mxu0 %v106
    %263 = vmatmul.f32.gmra.mxu0 %v245
    %v264 = vpop.f32.mrf.mxu0
    %v265 = vadd.f32 0.0, %v264
    %266 = vdwg.mxu0
    %v268 = vrot.slane %v265, 4
    %v270 = vadd.f32 %v101, %v268
    %v271 = vxor.u32 %v270, 2147483648
    %v272 = vmul.f32 %v271, 1.442695
    %v273 = vpow.pop %v272
    %v274 = vadd.f32 %v273, 1.0
    %v275 = vrcp.pop %v274
    %v276 = vmul.f32 %v274, %v275
    %v277 = vsub.f32 1.0, %v276
    %v278 = vmul.f32 %v275, %v277
    %v279 = vadd.f32 %v275, %v278
    %vm280 = vweird.f32 %v274
    %vm281 = vweird.f32 %v275
    %vm282 = vmor %vm280, %vm281
    %v283 = vsel %vm282, %v275, %v279
    %v284 = vand.u32 2147483647, %v274
    %vm285 = vcmp.eq.f32.partialorder %v284, 8.507059e+37
    %v286 = vand.u32 %v274, 2147483648
    %v287 = vor.u32 1.1754944e-38, %v286
    %v288 = vsel %vm285, %v287, %v283
    %v289 = vmul.f32 1.0, %v288
    %v290 = vtanh.pop %v270
    %v292 = vrot.slane %v234, 6
    %v294 = vmul.f32 %v289, %v292
    %296 = vrot.lane.b32.xlu0 %v290, 64
    %v297 = vpop.permute.xlu0 %296
    %v299 = vmul.f32 %v289, %v297
    %301 = vrot.lane.b32.xlu0 %v299, 32
    %v302 = vpop.permute.xlu0 %301
    %v304 = vadd.f32 %v294, %v302
    %v305 = vtanh.pop %v304
    %307 = vrot.lane.b32.xlu0 %v305, 64
    %v308 = vpop.permute.xlu0 %307
    %v310 = vmul.f32 %v289, %v308
    %v312 = vrot.slane %v310, 4
    %313 = vrot.lane.b32.xlu0 %v312, 32
    %v314 = vpop.permute.xlu0 %313
    %v315 = vsel %vm110, %v314, 0
    %317 = vmatpush.msra.mxu0 0.0
    %318 = vmatpush.msra.mxu0 0.0
    %319 = vmatpush.msra.mxu0 0.0
    %320 = vmatpush.msra.mxu0 0.0
    %321 = vmatpush.msra.mxu0 0.0
    %322 = vmatpush.msra.mxu0 0.0
    %323 = vmatpush.msra.mxu0 0.0
    %324 = vmatpush.msra.mxu0 0.0
    %325 = vmatpush.msra.mxu0 0.0
    %326 = vmatpush.msra.mxu0 0.0
    %327 = vmatpush.msra.mxu0 0.0
    %328 = vmatpush.msra.mxu0 0.0
    %329 = vmatpush.msra.mxu0 %v109
    %330 = vmatpush.msra.mxu0 %v108
    %331 = vmatpush.msra.mxu0 %v107
    %332 = vmatpush.msra.mxu0 %v106
    %333 = vmatmul.f32.gmra.mxu0 %v315
    %v334 = vpop.f32.mrf.mxu0
    %v335 = vadd.f32 0.0, %v334
    %336 = vdwg.mxu0
    %v338 = vrot.slane %v335, 2
    %v340 = vadd.f32 %v101, %v338
    %v341 = vxor.u32 %v340, 2147483648
    %v342 = vmul.f32 %v341, 1.442695
    %v343 = vpow.pop %v342
    %v344 = vadd.f32 %v343, 1.0
    %v345 = vrcp.pop %v344
    %v346 = vmul.f32 %v344, %v345
    %v347 = vsub.f32 1.0, %v346
    %v348 = vmul.f32 %v345, %v347
    %v349 = vadd.f32 %v345, %v348
    %vm350 = vweird.f32 %v344
    %vm351 = vweird.f32 %v345
    %vm352 = vmor %vm350, %vm351
    %v353 = vsel %vm352, %v345, %v349
    %v354 = vand.u32 2147483647, %v344
    %vm355 = vcmp.eq.f32.partialorder %v354, 8.507059e+37
    %v356 = vand.u32 %v344, 2147483648
    %v357 = vor.u32 1.1754944e-38, %v356
    %v358 = vsel %vm355, %v357, %v353
    %v359 = vmul.f32 1.0, %v358
    %v360 = vtanh.pop %v340
    %v362 = vrot.slane %v304, 6
    %v364 = vmul.f32 %v359, %v362
    %366 = vrot.lane.b32.xlu0 %v360, 64
    %v367 = vpop.permute.xlu0 %366
    %v369 = vmul.f32 %v359, %v367
    %371 = vrot.lane.b32.xlu0 %v369, 32
    %v372 = vpop.permute.xlu0 %371
    %v374 = vadd.f32 %v364, %v372
    %v375 = vtanh.pop %v374
    %377 = vrot.lane.b32.xlu0 %v375, 64
    %v378 = vpop.permute.xlu0 %377
    %v380 = vmul.f32 %v359, %v378
    %v382 = vrot.slane %v380, 6
    %383 = vrot.lane.b32.xlu0 %v382, 32
    %v384 = vpop.permute.xlu0 %383
    %v385 = vsel %vm110, %v384, 0
    %387 = vmatpush.msra.mxu0 0.0
    %388 = vmatpush.msra.mxu0 0.0
    %389 = vmatpush.msra.mxu0 0.0
    %390 = vmatpush.msra.mxu0 0.0
    %391 = vmatpush.msra.mxu0 0.0
    %392 = vmatpush.msra.mxu0 0.0
    %393 = vmatpush.msra.mxu0 0.0
    %394 = vmatpush.msra.mxu0 0.0
    %395 = vmatpush.msra.mxu0 0.0
    %396 = vmatpush.msra.mxu0 0.0
    %397 = vmatpush.msra.mxu0 0.0
    %398 = vmatpush.msra.mxu0 0.0
    %399 = vmatpush.msra.mxu0 %v109
    %400 = vmatpush.msra.mxu0 %v108
    %401 = vmatpush.msra.mxu0 %v107
    %402 = vmatpush.msra.mxu0 %v106
    %403 = vmatmul.f32.gmra.mxu0 %v385
    %v404 = vpop.f32.mrf.mxu0
    %v405 = vadd.f32 0.0, %v404
    %406 = vdwg.mxu0
    %v407 = vadd.f32 %v104, %v405
    %v408 = vxor.u32 %v407, 2147483648
    %v409 = vmul.f32 %v408, 1.442695
    %v410 = vpow.pop %v409
    %v411 = vadd.f32 %v410, 1.0
    %v412 = vrcp.pop %v411
    %v413 = vmul.f32 %v411, %v412
    %v414 = vsub.f32 1.0, %v413
    %v415 = vmul.f32 %v412, %v414
    %v416 = vadd.f32 %v412, %v415
    %vm417 = vweird.f32 %v411
    %vm418 = vweird.f32 %v412
    %vm419 = vmor %vm417, %vm418
    %v420 = vsel %vm419, %v412, %v416
    %v421 = vand.u32 2147483647, %v411
    %vm422 = vcmp.eq.f32.partialorder %v421, 8.507059e+37
    %v423 = vand.u32 %v411, 2147483648
    %v424 = vor.u32 1.1754944e-38, %v423
    %v425 = vsel %vm422, %v424, %v420
    %v426 = vmul.f32 1.0, %v425
    %v427 = vtanh.pop %v407
    %v429 = vrot.slane %v374, 6
    %v431 = vmul.f32 %v426, %v429
    %433 = vrot.lane.b32.xlu0 %v427, 64
    %v434 = vpop.permute.xlu0 %433
    %v436 = vmul.f32 %v426, %v434
    %438 = vrot.lane.b32.xlu0 %v436, 32
    %v439 = vpop.permute.xlu0 %438
    %v441 = vadd.f32 %v431, %v439
    %v442 = vtanh.pop %v441
    %444 = vrot.lane.b32.xlu0 %v442, 64
    %v445 = vpop.permute.xlu0 %444
    %v447 = vmul.f32 %v426, %v445
    %449 = vrot.lane.b32.xlu0 %v447, 32
    %v450 = vpop.permute.xlu0 %449
    %v451 = vsel %vm110, %v450, 0
    %453 = vmatpush.msra.mxu0 0.0
    %454 = vmatpush.msra.mxu0 0.0
    %455 = vmatpush.msra.mxu0 0.0
    %456 = vmatpush.msra.mxu0 0.0
    %457 = vmatpush.msra.mxu0 0.0
    %458 = vmatpush.msra.mxu0 0.0
    %459 = vmatpush.msra.mxu0 0.0
    %460 = vmatpush.msra.mxu0 0.0
    %461 = vmatpush.msra.mxu0 0.0
    %462 = vmatpush.msra.mxu0 0.0
    %463 = vmatpush.msra.mxu0 0.0
    %464 = vmatpush.msra.mxu0 0.0
    %465 = vmatpush.msra.mxu0 %v109
    %466 = vmatpush.msra.mxu0 %v108
    %467 = vmatpush.msra.mxu0 %v107
    %468 = vmatpush.msra.mxu0 %v106
    %469 = vmatmul.f32.gmra.mxu0 %v451
    %v470 = vpop.f32.mrf.mxu0
    %v471 = vadd.f32 0.0, %v470
    %472 = vdwg.mxu0
    %v474 = vrot.slane %v471, 6
    %v476 = vadd.f32 %v104, %v474
    %v477 = vxor.u32 %v476, 2147483648
    %v478 = vmul.f32 %v477, 1.442695
    %v479 = vpow.pop %v478
    %v480 = vadd.f32 %v479, 1.0
    %v481 = vrcp.pop %v480
    %v482 = vmul.f32 %v480, %v481
    %v483 = vsub.f32 1.0, %v482
    %v484 = vmul.f32 %v481, %v483
    %v485 = vadd.f32 %v481, %v484
    %vm486 = vweird.f32 %v480
    %vm487 = vweird.f32 %v481
    %vm488 = vmor %vm486, %vm487
    %v489 = vsel %vm488, %v481, %v485
    %v490 = vand.u32 2147483647, %v480
    %vm491 = vcmp.eq.f32.partialorder %v490, 8.507059e+37
    %v492 = vand.u32 %v480, 2147483648
    %v493 = vor.u32 1.1754944e-38, %v492
    %v494 = vsel %vm491, %v493, %v489
    %v495 = vmul.f32 1.0, %v494
    %v496 = vtanh.pop %v476
    %v498 = vrot.slane %v441, 6
    %v500 = vmul.f32 %v495, %v498
    %502 = vrot.lane.b32.xlu0 %v496, 64
    %v503 = vpop.permute.xlu0 %502
    %v505 = vmul.f32 %v495, %v503
    %507 = vrot.lane.b32.xlu0 %v505, 32
    %v508 = vpop.permute.xlu0 %507
    %v510 = vadd.f32 %v500, %v508
    %v511 = vtanh.pop %v510
    %513 = vrot.lane.b32.xlu0 %v511, 64
    %v514 = vpop.permute.xlu0 %513
    %v516 = vmul.f32 %v495, %v514
    %v518 = vrot.slane %v516, 2
    %519 = vrot.lane.b32.xlu0 %v518, 32
    %v520 = vpop.permute.xlu0 %519
    %v521 = vsel %vm110, %v520, 0
    %523 = vmatpush.msra.mxu0 0.0
    %524 = vmatpush.msra.mxu0 0.0
    %525 = vmatpush.msra.mxu0 0.0
    %526 = vmatpush.msra.mxu0 0.0
    %527 = vmatpush.msra.mxu0 0.0
    %528 = vmatpush.msra.mxu0 0.0
    %529 = vmatpush.msra.mxu0 0.0
    %530 = vmatpush.msra.mxu0 0.0
    %531 = vmatpush.msra.mxu0 0.0
    %532 = vmatpush.msra.mxu0 0.0
    %533 = vmatpush.msra.mxu0 0.0
    %534 = vmatpush.msra.mxu0 0.0
    %535 = vmatpush.msra.mxu0 %v109
    %536 = vmatpush.msra.mxu0 %v108
    %537 = vmatpush.msra.mxu0 %v107
    %538 = vmatpush.msra.mxu0 %v106
    %539 = vmatmul.f32.gmra.mxu0 %v521
    %v540 = vpop.f32.mrf.mxu0
    %v541 = vadd.f32 0.0, %v540
    %542 = vdwg.mxu0
    %v544 = vrot.slane %v541, 4
    %v546 = vadd.f32 %v104, %v544
    %v547 = vxor.u32 %v546, 2147483648
    %v548 = vmul.f32 %v547, 1.442695
    %v549 = vpow.pop %v548
    %v550 = vadd.f32 %v549, 1.0
    %v551 = vrcp.pop %v550
    %v552 = vmul.f32 %v550, %v551
    %v553 = vsub.f32 1.0, %v552
    %v554 = vmul.f32 %v551, %v553
    %v555 = vadd.f32 %v551, %v554
    %vm556 = vweird.f32 %v550
    %vm557 = vweird.f32 %v551
    %vm558 = vmor %vm556, %vm557
    %v559 = vsel %vm558, %v551, %v555
    %v560 = vand.u32 2147483647, %v550
    %vm561 = vcmp.eq.f32.partialorder %v560, 8.507059e+37
    %v562 = vand.u32 %v550, 2147483648
    %v563 = vor.u32 1.1754944e-38, %v562
    %v564 = vsel %vm561, %v563, %v559
    %v565 = vmul.f32 1.0, %v564
    %v566 = vtanh.pop %v546
    %v568 = vrot.slane %v510, 6
    %v570 = vmul.f32 %v565, %v568
    %572 = vrot.lane.b32.xlu0 %v566, 64
    %v573 = vpop.permute.xlu0 %572
    %v575 = vmul.f32 %v565, %v573
    %577 = vrot.lane.b32.xlu0 %v575, 32
    %v578 = vpop.permute.xlu0 %577
    %v580 = vadd.f32 %v570, %v578
    %v581 = vtanh.pop %v580
    %583 = vrot.lane.b32.xlu0 %v581, 64
    %v584 = vpop.permute.xlu0 %583
    %v586 = vmul.f32 %v565, %v584
    %v588 = vrot.slane %v586, 4
    %589 = vrot.lane.b32.xlu0 %v588, 32
    %v590 = vpop.permute.xlu0 %589
    %v591 = vsel %vm110, %v590, 0
    %593 = vmatpush.msra.mxu0 0.0
    %594 = vmatpush.msra.mxu0 0.0
    %595 = vmatpush.msra.mxu0 0.0
    %596 = vmatpush.msra.mxu0 0.0
    %597 = vmatpush.msra.mxu0 0.0
    %598 = vmatpush.msra.mxu0 0.0
    %599 = vmatpush.msra.mxu0 0.0
    %600 = vmatpush.msra.mxu0 0.0
    %601 = vmatpush.msra.mxu0 0.0
    %602 = vmatpush.msra.mxu0 0.0
    %603 = vmatpush.msra.mxu0 0.0
    %604 = vmatpush.msra.mxu0 0.0
    %605 = vmatpush.msra.mxu0 %v109
    %606 = vmatpush.msra.mxu0 %v108
    %607 = vmatpush.msra.mxu0 %v107
    %608 = vmatpush.msra.mxu0 %v106
    %609 = vmatmul.f32.gmra.mxu0 %v591
    %v610 = vpop.f32.mrf.mxu0
    %v611 = vadd.f32 0.0, %v610
    %612 = vdwg.mxu0
    %v614 = vrot.slane %v611, 2
    %v616 = vadd.f32 %v104, %v614
    %v617 = vxor.u32 %v616, 2147483648
    %v618 = vmul.f32 %v617, 1.442695
    %v619 = vpow.pop %v618
    %v620 = vadd.f32 %v619, 1.0
    %v621 = vrcp.pop %v620
    %v622 = vmul.f32 %v620, %v621
    %v623 = vsub.f32 1.0, %v622
    %v624 = vmul.f32 %v621, %v623
    %v625 = vadd.f32 %v621, %v624
    %vm626 = vweird.f32 %v620
    %vm627 = vweird.f32 %v621
    %vm628 = vmor %vm626, %vm627
    %v629 = vsel %vm628, %v621, %v625
    %v630 = vand.u32 2147483647, %v620
    %vm631 = vcmp.eq.f32.partialorder %v630, 8.507059e+37
    %v632 = vand.u32 %v620, 2147483648
    %v633 = vor.u32 1.1754944e-38, %v632
    %v634 = vsel %vm631, %v633, %v629
    %v635 = vmul.f32 1.0, %v634
    %v636 = vtanh.pop %v616
    %v638 = vrot.slane %v580, 6
    %v640 = vmul.f32 %v635, %v638
    %642 = vrot.lane.b32.xlu0 %v636, 64
    %v643 = vpop.permute.xlu0 %642
    %v645 = vmul.f32 %v635, %v643
    %647 = vrot.lane.b32.xlu0 %v645, 32
    %v648 = vpop.permute.xlu0 %647
    %v650 = vadd.f32 %v640, %v648
    %v651 = vtanh.pop %v650
    %653 = vrot.lane.b32.xlu0 %v651, 64
    %v654 = vpop.permute.xlu0 %653
    %v656 = vmul.f32 %v635, %v654
    %vm657 = vcmask 1041408
    %v658 = vsel %vm657, %v171, %v240
    %v659 = vsel %vm79, %v658, %v310
    %vm660 = vcmask 1045504
    %v661 = vsel %vm660, %v659, %v380
    %v662 = vsel %vm657, %v447, %v516
    %v663 = vsel %vm79, %v662, %v586
    %v664 = vsel %vm660, %v663, %v656
    %v665 = vld [vmem:[#allocation2] sm:$0xff]
    %v666 = vld [vmem:[#allocation2 + $0x8] sm:$0xff]
    %v667 = vld [vmem:[#allocation2 + $0x10] sm:$0xff]
    %v668 = vld [vmem:[#allocation2 + $0x18] sm:$0xff]
    %v669 = vld [vmem:[%s5] sm:$0x1]
    %v671 = vperm.slane %v669, 0
    %675 = vrot.lane.b32.xlu0 %v661, 32
    %v676 = vpop.permute.xlu0 %675
    %677 = vrot.lane.b32.xlu0 %v664, 32
    %v678 = vpop.permute.xlu0 %677
    %v679 = vsel %vm110, %v676, 0
    %v681 = vsel %vm110, %v678, 0
    %683 = vmatpush.msra.mxu0 0.0
    %684 = vmatpush.msra.mxu0 0.0
    %685 = vmatpush.msra.mxu0 0.0
    %686 = vmatpush.msra.mxu0 0.0
    %687 = vmatpush.msra.mxu0 0.0
    %688 = vmatpush.msra.mxu0 0.0
    %689 = vmatpush.msra.mxu0 0.0
    %690 = vmatpush.msra.mxu0 0.0
    %691 = vmatpush.msra.mxu0 0.0
    %692 = vmatpush.msra.mxu0 0.0
    %693 = vmatpush.msra.mxu0 0.0
    %694 = vmatpush.msra.mxu0 0.0
    %695 = vmatpush.msra.mxu0 %v668
    %696 = vmatpush.msra.mxu0 %v667
    %697 = vmatpush.msra.mxu0 %v666
    %698 = vmatpush.msra.mxu0 %v665
    %699 = vmatmul.f32.gmra.mxu0 %v679
    %v700 = vpop.f32.mrf.mxu0
    %v701 = vadd.f32 %v671, %v700
    %702 = vmatmul.f32.gmra.mxu0 %v681
    %v703 = vpop.f32.mrf.mxu0
    %v704 = vadd.f32 %v671, %v703
    %705 = vdwg.mxu0
    %v706 = vld [vmem:[#allocation5] sm:$0xff]
    %v707 = vld [vmem:[#allocation5 + $0x8] sm:$0xff]
    %v708 = vld [vmem:[#allocation5 + $0x10] sm:$0xff]
    %v709 = vld [vmem:[#allocation5 + $0x18] sm:$0xff]
    %710 = vmatpush.msra.mxu0 0.0
    %711 = vmatpush.msra.mxu0 0.0
    %712 = vmatpush.msra.mxu0 0.0
    %713 = vmatpush.msra.mxu0 0.0
    %714 = vmatpush.msra.mxu0 0.0
    %715 = vmatpush.msra.mxu0 0.0
    %716 = vmatpush.msra.mxu0 0.0
    %717 = vmatpush.msra.mxu0 0.0
    %718 = vmatpush.msra.mxu0 0.0
    %719 = vmatpush.msra.mxu0 0.0
    %720 = vmatpush.msra.mxu0 0.0
    %721 = vmatpush.msra.mxu0 0.0
    %722 = vmatpush.msra.mxu0 %v709
    %723 = vmatpush.msra.mxu0 %v708
    %724 = vmatpush.msra.mxu0 %v707
    %725 = vmatpush.msra.mxu0 %v706
    %726 = vmatmul.f32.gmra.mxu0 %v112
    %v727 = vpop.f32.mrf.mxu0
    %v728 = vadd.f32 0.0, %v727
    %729 = vdwg.mxu0
    %v730 = vadd.f32 %v701, %v728
    %v731 = vxor.u32 %v730, 2147483648
    %v732 = vmul.f32 %v731, 1.442695
    %v733 = vpow.pop %v732
    %v734 = vadd.f32 %v733, 1.0
    %v735 = vrcp.pop %v734
    %v736 = vmul.f32 %v734, %v735
    %v737 = vsub.f32 1.0, %v736
    %v738 = vmul.f32 %v735, %v737
    %v739 = vadd.f32 %v735, %v738
    %vm740 = vweird.f32 %v734
    %vm741 = vweird.f32 %v735
    %vm742 = vmor %vm740, %vm741
    %v743 = vsel %vm742, %v735, %v739
    %v744 = vand.u32 2147483647, %v734
    %vm745 = vcmp.eq.f32.partialorder %v744, 8.507059e+37
    %v746 = vand.u32 %v734, 2147483648
    %v747 = vor.u32 1.1754944e-38, %v746
    %v748 = vsel %vm745, %v747, %v743
    %v749 = vmul.f32 1.0, %v748
    %v750 = vtanh.pop %v730
    %v751 = vmul.f32 %v749, 0.0
    %753 = vrot.lane.b32.xlu0 %v750, 64
    %v754 = vpop.permute.xlu0 %753
    %v756 = vmul.f32 %v749, %v754
    %758 = vrot.lane.b32.xlu0 %v756, 32
    %v759 = vpop.permute.xlu0 %758
    %v761 = vadd.f32 %v751, %v759
    %v762 = vtanh.pop %v761
    %764 = vrot.lane.b32.xlu0 %v762, 64
    %v765 = vpop.permute.xlu0 %764
    %v767 = vmul.f32 %v749, %v765
    %769 = vrot.lane.b32.xlu0 %v767, 32
    %v770 = vpop.permute.xlu0 %769
    %v771 = vsel %vm110, %v770, 0
    %773 = vmatpush.msra.mxu0 0.0
    %774 = vmatpush.msra.mxu0 0.0
    %775 = vmatpush.msra.mxu0 0.0
    %776 = vmatpush.msra.mxu0 0.0
    %777 = vmatpush.msra.mxu0 0.0
    %778 = vmatpush.msra.mxu0 0.0
    %779 = vmatpush.msra.mxu0 0.0
    %780 = vmatpush.msra.mxu0 0.0
    %781 = vmatpush.msra.mxu0 0.0
    %782 = vmatpush.msra.mxu0 0.0
    %783 = vmatpush.msra.mxu0 0.0
    %784 = vmatpush.msra.mxu0 0.0
    %785 = vmatpush.msra.mxu0 %v709
    %786 = vmatpush.msra.mxu0 %v708
    %787 = vmatpush.msra.mxu0 %v707
    %788 = vmatpush.msra.mxu0 %v706
    %789 = vmatmul.f32.gmra.mxu0 %v771
    %v790 = vpop.f32.mrf.mxu0
    %v791 = vadd.f32 0.0, %v790
    %792 = vdwg.mxu0
    %v794 = vrot.slane %v791, 6
    %v796 = vadd.f32 %v701, %v794
    %v797 = vxor.u32 %v796, 2147483648
    %v798 = vmul.f32 %v797, 1.442695
    %v799 = vpow.pop %v798
    %v800 = vadd.f32 %v799, 1.0
    %v801 = vrcp.pop %v800
    %v802 = vmul.f32 %v800, %v801
    %v803 = vsub.f32 1.0, %v802
    %v804 = vmul.f32 %v801, %v803
    %v805 = vadd.f32 %v801, %v804
    %vm806 = vweird.f32 %v800
    %vm807 = vweird.f32 %v801
    %vm808 = vmor %vm806, %vm807
    %v809 = vsel %vm808, %v801, %v805
    %v810 = vand.u32 2147483647, %v800
    %vm811 = vcmp.eq.f32.partialorder %v810, 8.507059e+37
    %v812 = vand.u32 %v800, 2147483648
    %v813 = vor.u32 1.1754944e-38, %v812
    %v814 = vsel %vm811, %v813, %v809
    %v815 = vmul.f32 1.0, %v814
    %v816 = vtanh.pop %v796
    %v818 = vrot.slane %v761, 6
    %v820 = vmul.f32 %v815, %v818
    %822 = vrot.lane.b32.xlu0 %v816, 64
    %v823 = vpop.permute.xlu0 %822
    %v825 = vmul.f32 %v815, %v823
    %827 = vrot.lane.b32.xlu0 %v825, 32
    %v828 = vpop.permute.xlu0 %827
    %v830 = vadd.f32 %v820, %v828
    %v831 = vtanh.pop %v830
    %833 = vrot.lane.b32.xlu0 %v831, 64
    %v834 = vpop.permute.xlu0 %833
    %v836 = vmul.f32 %v815, %v834
    %v838 = vrot.slane %v836, 2
    %839 = vrot.lane.b32.xlu0 %v838, 32
    %v840 = vpop.permute.xlu0 %839
    %v841 = vsel %vm110, %v840, 0
    %843 = vmatpush.msra.mxu0 0.0
    %844 = vmatpush.msra.mxu0 0.0
    %845 = vmatpush.msra.mxu0 0.0
    %846 = vmatpush.msra.mxu0 0.0
    %847 = vmatpush.msra.mxu0 0.0
    %848 = vmatpush.msra.mxu0 0.0
    %849 = vmatpush.msra.mxu0 0.0
    %850 = vmatpush.msra.mxu0 0.0
    %851 = vmatpush.msra.mxu0 0.0
    %852 = vmatpush.msra.mxu0 0.0
    %853 = vmatpush.msra.mxu0 0.0
    %854 = vmatpush.msra.mxu0 0.0
    %855 = vmatpush.msra.mxu0 %v709
    %856 = vmatpush.msra.mxu0 %v708
    %857 = vmatpush.msra.mxu0 %v707
    %858 = vmatpush.msra.mxu0 %v706
    %859 = vmatmul.f32.gmra.mxu0 %v841
    %v860 = vpop.f32.mrf.mxu0
    %v861 = vadd.f32 0.0, %v860
    %862 = vdwg.mxu0
    %v864 = vrot.slane %v861, 4
    %v866 = vadd.f32 %v701, %v864
    %v867 = vxor.u32 %v866, 2147483648
    %v868 = vmul.f32 %v867, 1.442695
    %v869 = vpow.pop %v868
    %v870 = vadd.f32 %v869, 1.0
    %v871 = vrcp.pop %v870
    %v872 = vmul.f32 %v870, %v871
    %v873 = vsub.f32 1.0, %v872
    %v874 = vmul.f32 %v871, %v873
    %v875 = vadd.f32 %v871, %v874
    %vm876 = vweird.f32 %v870
    %vm877 = vweird.f32 %v871
    %vm878 = vmor %vm876, %vm877
    %v879 = vsel %vm878, %v871, %v875
    %v880 = vand.u32 2147483647, %v870
    %vm881 = vcmp.eq.f32.partialorder %v880, 8.507059e+37
    %v882 = vand.u32 %v870, 2147483648
    %v883 = vor.u32 1.1754944e-38, %v882
    %v884 = vsel %vm881, %v883, %v879
    %v885 = vmul.f32 1.0, %v884
    %v886 = vtanh.pop %v866
    %v888 = vrot.slane %v830, 6
    %v890 = vmul.f32 %v885, %v888
    %892 = vrot.lane.b32.xlu0 %v886, 64
    %v893 = vpop.permute.xlu0 %892
    %v895 = vmul.f32 %v885, %v893
    %897 = vrot.lane.b32.xlu0 %v895, 32
    %v898 = vpop.permute.xlu0 %897
    %v900 = vadd.f32 %v890, %v898
    %v901 = vtanh.pop %v900
    %903 = vrot.lane.b32.xlu0 %v901, 64
    %v904 = vpop.permute.xlu0 %903
    %v906 = vmul.f32 %v885, %v904
    %v908 = vrot.slane %v906, 4
    %909 = vrot.lane.b32.xlu0 %v908, 32
    %v910 = vpop.permute.xlu0 %909
    %v911 = vsel %vm110, %v910, 0
    %913 = vmatpush.msra.mxu0 0.0
    %914 = vmatpush.msra.mxu0 0.0
    %915 = vmatpush.msra.mxu0 0.0
    %916 = vmatpush.msra.mxu0 0.0
    %917 = vmatpush.msra.mxu0 0.0
    %918 = vmatpush.msra.mxu0 0.0
    %919 = vmatpush.msra.mxu0 0.0
    %920 = vmatpush.msra.mxu0 0.0
    %921 = vmatpush.msra.mxu0 0.0
    %922 = vmatpush.msra.mxu0 0.0
    %923 = vmatpush.msra.mxu0 0.0
    %924 = vmatpush.msra.mxu0 0.0
    %925 = vmatpush.msra.mxu0 %v709
    %926 = vmatpush.msra.mxu0 %v708
    %927 = vmatpush.msra.mxu0 %v707
    %928 = vmatpush.msra.mxu0 %v706
    %929 = vmatmul.f32.gmra.mxu0 %v911
    %v930 = vpop.f32.mrf.mxu0
    %v931 = vadd.f32 0.0, %v930
    %932 = vdwg.mxu0
    %v934 = vrot.slane %v931, 2
    %v936 = vadd.f32 %v701, %v934
    %v937 = vxor.u32 %v936, 2147483648
    %v938 = vmul.f32 %v937, 1.442695
    %v939 = vpow.pop %v938
    %v940 = vadd.f32 %v939, 1.0
    %v941 = vrcp.pop %v940
    %v942 = vmul.f32 %v940, %v941
    %v943 = vsub.f32 1.0, %v942
    %v944 = vmul.f32 %v941, %v943
    %v945 = vadd.f32 %v941, %v944
    %vm946 = vweird.f32 %v940
    %vm947 = vweird.f32 %v941
    %vm948 = vmor %vm946, %vm947
    %v949 = vsel %vm948, %v941, %v945
    %v950 = vand.u32 2147483647, %v940
    %vm951 = vcmp.eq.f32.partialorder %v950, 8.507059e+37
    %v952 = vand.u32 %v940, 2147483648
    %v953 = vor.u32 1.1754944e-38, %v952
    %v954 = vsel %vm951, %v953, %v949
    %v955 = vmul.f32 1.0, %v954
    %v956 = vtanh.pop %v936
    %v958 = vrot.slane %v900, 6
    %v960 = vmul.f32 %v955, %v958
    %962 = vrot.lane.b32.xlu0 %v956, 64
    %v963 = vpop.permute.xlu0 %962
    %v965 = vmul.f32 %v955, %v963
    %967 = vrot.lane.b32.xlu0 %v965, 32
    %v968 = vpop.permute.xlu0 %967
    %v970 = vadd.f32 %v960, %v968
    %v971 = vtanh.pop %v970
    %973 = vrot.lane.b32.xlu0 %v971, 64
    %v974 = vpop.permute.xlu0 %973
    %v976 = vmul.f32 %v955, %v974
    %v978 = vrot.slane %v976, 6
    %979 = vrot.lane.b32.xlu0 %v978, 32
    %v980 = vpop.permute.xlu0 %979
    %v981 = vsel %vm110, %v980, 0
    %983 = vmatpush.msra.mxu0 0.0
    %984 = vmatpush.msra.mxu0 0.0
    %985 = vmatpush.msra.mxu0 0.0
    %986 = vmatpush.msra.mxu0 0.0
    %987 = vmatpush.msra.mxu0 0.0
    %988 = vmatpush.msra.mxu0 0.0
    %989 = vmatpush.msra.mxu0 0.0
    %990 = vmatpush.msra.mxu0 0.0
    %991 = vmatpush.msra.mxu0 0.0
    %992 = vmatpush.msra.mxu0 0.0
    %993 = vmatpush.msra.mxu0 0.0
    %994 = vmatpush.msra.mxu0 0.0
    %995 = vmatpush.msra.mxu0 %v709
    %996 = vmatpush.msra.mxu0 %v708
    %997 = vmatpush.msra.mxu0 %v707
    %998 = vmatpush.msra.mxu0 %v706
    %999 = vmatmul.f32.gmra.mxu0 %v981
    %v1000 = vpop.f32.mrf.mxu0
    %v1001 = vadd.f32 0.0, %v1000
    %1002 = vdwg.mxu0
    %v1003 = vadd.f32 %v704, %v1001
    %v1004 = vxor.u32 %v1003, 2147483648
    %v1005 = vmul.f32 %v1004, 1.442695
    %v1006 = vpow.pop %v1005
    %v1007 = vadd.f32 %v1006, 1.0
    %v1008 = vrcp.pop %v1007
    %v1009 = vmul.f32 %v1007, %v1008
    %v1010 = vsub.f32 1.0, %v1009
    %v1011 = vmul.f32 %v1008, %v1010
    %v1012 = vadd.f32 %v1008, %v1011
    %vm1013 = vweird.f32 %v1007
    %vm1014 = vweird.f32 %v1008
    %vm1015 = vmor %vm1013, %vm1014
    %v1016 = vsel %vm1015, %v1008, %v1012
    %v1017 = vand.u32 2147483647, %v1007
    %vm1018 = vcmp.eq.f32.partialorder %v1017, 8.507059e+37
    %v1019 = vand.u32 %v1007, 2147483648
    %v1020 = vor.u32 1.1754944e-38, %v1019
    %v1021 = vsel %vm1018, %v1020, %v1016
    %v1022 = vmul.f32 1.0, %v1021
    %v1023 = vtanh.pop %v1003
    %v1025 = vrot.slane %v970, 6
    %v1027 = vmul.f32 %v1022, %v1025
    %1029 = vrot.lane.b32.xlu0 %v1023, 64
    %v1030 = vpop.permute.xlu0 %1029
    %v1032 = vmul.f32 %v1022, %v1030
    %1034 = vrot.lane.b32.xlu0 %v1032, 32
    %v1035 = vpop.permute.xlu0 %1034
    %v1037 = vadd.f32 %v1027, %v1035
    %v1038 = vtanh.pop %v1037
    %1040 = vrot.lane.b32.xlu0 %v1038, 64
    %v1041 = vpop.permute.xlu0 %1040
    %v1043 = vmul.f32 %v1022, %v1041
    %1045 = vrot.lane.b32.xlu0 %v1043, 32
    %v1046 = vpop.permute.xlu0 %1045
    %v1047 = vsel %vm110, %v1046, 0
    %1049 = vmatpush.msra.mxu0 0.0
    %1050 = vmatpush.msra.mxu0 0.0
    %1051 = vmatpush.msra.mxu0 0.0
    %1052 = vmatpush.msra.mxu0 0.0
    %1053 = vmatpush.msra.mxu0 0.0
    %1054 = vmatpush.msra.mxu0 0.0
    %1055 = vmatpush.msra.mxu0 0.0
    %1056 = vmatpush.msra.mxu0 0.0
    %1057 = vmatpush.msra.mxu0 0.0
    %1058 = vmatpush.msra.mxu0 0.0
    %1059 = vmatpush.msra.mxu0 0.0
    %1060 = vmatpush.msra.mxu0 0.0
    %1061 = vmatpush.msra.mxu0 %v709
    %1062 = vmatpush.msra.mxu0 %v708
    %1063 = vmatpush.msra.mxu0 %v707
    %1064 = vmatpush.msra.mxu0 %v706
    %1065 = vmatmul.f32.gmra.mxu0 %v1047
    %v1066 = vpop.f32.mrf.mxu0
    %v1067 = vadd.f32 0.0, %v1066
    %1068 = vdwg.mxu0
    %v1070 = vrot.slane %v1067, 6
    %v1072 = vadd.f32 %v704, %v1070
    %v1073 = vxor.u32 %v1072, 2147483648
    %v1074 = vmul.f32 %v1073, 1.442695
    %v1075 = vpow.pop %v1074
    %v1076 = vadd.f32 %v1075, 1.0
    %v1077 = vrcp.pop %v1076
    %v1078 = vmul.f32 %v1076, %v1077
    %v1079 = vsub.f32 1.0, %v1078
    %v1080 = vmul.f32 %v1077, %v1079
    %v1081 = vadd.f32 %v1077, %v1080
    %vm1082 = vweird.f32 %v1076
    %vm1083 = vweird.f32 %v1077
    %vm1084 = vmor %vm1082, %vm1083
    %v1085 = vsel %vm1084, %v1077, %v1081
    %v1086 = vand.u32 2147483647, %v1076
    %vm1087 = vcmp.eq.f32.partialorder %v1086, 8.507059e+37
    %v1088 = vand.u32 %v1076, 2147483648
    %v1089 = vor.u32 1.1754944e-38, %v1088
    %v1090 = vsel %vm1087, %v1089, %v1085
    %v1091 = vmul.f32 1.0, %v1090
    %v1092 = vtanh.pop %v1072
    %v1094 = vrot.slane %v1037, 6
    %v1096 = vmul.f32 %v1091, %v1094
    %1098 = vrot.lane.b32.xlu0 %v1092, 64
    %v1099 = vpop.permute.xlu0 %1098
    %v1101 = vmul.f32 %v1091, %v1099
    %1103 = vrot.lane.b32.xlu0 %v1101, 32
    %v1104 = vpop.permute.xlu0 %1103
    %v1106 = vadd.f32 %v1096, %v1104
    %v1107 = vtanh.pop %v1106
    %1109 = vrot.lane.b32.xlu0 %v1107, 64
    %v1110 = vpop.permute.xlu0 %1109
    %v1112 = vmul.f32 %v1091, %v1110
    %v1114 = vrot.slane %v1112, 2
    %1115 = vrot.lane.b32.xlu0 %v1114, 32
    %v1116 = vpop.permute.xlu0 %1115
    %v1117 = vsel %vm110, %v1116, 0
    %1119 = vmatpush.msra.mxu0 0.0
    %1120 = vmatpush.msra.mxu0 0.0
    %1121 = vmatpush.msra.mxu0 0.0
    %1122 = vmatpush.msra.mxu0 0.0
    %1123 = vmatpush.msra.mxu0 0.0
    %1124 = vmatpush.msra.mxu0 0.0
    %1125 = vmatpush.msra.mxu0 0.0
    %1126 = vmatpush.msra.mxu0 0.0
    %1127 = vmatpush.msra.mxu0 0.0
    %1128 = vmatpush.msra.mxu0 0.0
    %1129 = vmatpush.msra.mxu0 0.0
    %1130 = vmatpush.msra.mxu0 0.0
    %1131 = vmatpush.msra.mxu0 %v709
    %1132 = vmatpush.msra.mxu0 %v708
    %1133 = vmatpush.msra.mxu0 %v707
    %1134 = vmatpush.msra.mxu0 %v706
    %1135 = vmatmul.f32.gmra.mxu0 %v1117
    %v1136 = vpop.f32.mrf.mxu0
    %v1137 = vadd.f32 0.0, %v1136
    %1138 = vdwg.mxu0
    %v1140 = vrot.slane %v1137, 4
    %v1142 = vadd.f32 %v704, %v1140
    %v1143 = vxor.u32 %v1142, 2147483648
    %v1144 = vmul.f32 %v1143, 1.442695
    %v1145 = vpow.pop %v1144
    %v1146 = vadd.f32 %v1145, 1.0
    %v1147 = vrcp.pop %v1146
    %v1148 = vmul.f32 %v1146, %v1147
    %v1149 = vsub.f32 1.0, %v1148
    %v1150 = vmul.f32 %v1147, %v1149
    %v1151 = vadd.f32 %v1147, %v1150
    %vm1152 = vweird.f32 %v1146
    %vm1153 = vweird.f32 %v1147
    %vm1154 = vmor %vm1152, %vm1153
    %v1155 = vsel %vm1154, %v1147, %v1151
    %v1156 = vand.u32 2147483647, %v1146
    %vm1157 = vcmp.eq.f32.partialorder %v1156, 8.507059e+37
    %v1158 = vand.u32 %v1146, 2147483648
    %v1159 = vor.u32 1.1754944e-38, %v1158
    %v1160 = vsel %vm1157, %v1159, %v1155
    %v1161 = vmul.f32 1.0, %v1160
    %v1162 = vtanh.pop %v1142
    %v1164 = vrot.slane %v1106, 6
    %v1166 = vmul.f32 %v1161, %v1164
    %1168 = vrot.lane.b32.xlu0 %v1162, 64
    %v1169 = vpop.permute.xlu0 %1168
    %v1171 = vmul.f32 %v1161, %v1169
    %1173 = vrot.lane.b32.xlu0 %v1171, 32
    %v1174 = vpop.permute.xlu0 %1173
    %v1176 = vadd.f32 %v1166, %v1174
    %v1177 = vtanh.pop %v1176
    %1179 = vrot.lane.b32.xlu0 %v1177, 64
    %v1180 = vpop.permute.xlu0 %1179
    %v1182 = vmul.f32 %v1161, %v1180
    %v1184 = vrot.slane %v1182, 4
    %1185 = vrot.lane.b32.xlu0 %v1184, 32
    %v1186 = vpop.permute.xlu0 %1185
    %v1187 = vsel %vm110, %v1186, 0
    %1189 = vmatpush.msra.mxu0 0.0
    %1190 = vmatpush.msra.mxu0 0.0
    %1191 = vmatpush.msra.mxu0 0.0
    %1192 = vmatpush.msra.mxu0 0.0
    %1193 = vmatpush.msra.mxu0 0.0
    %1194 = vmatpush.msra.mxu0 0.0
    %1195 = vmatpush.msra.mxu0 0.0
    %1196 = vmatpush.msra.mxu0 0.0
    %1197 = vmatpush.msra.mxu0 0.0
    %1198 = vmatpush.msra.mxu0 0.0
    %1199 = vmatpush.msra.mxu0 0.0
    %1200 = vmatpush.msra.mxu0 0.0
    %1201 = vmatpush.msra.mxu0 %v709
    %1202 = vmatpush.msra.mxu0 %v708
    %1203 = vmatpush.msra.mxu0 %v707
    %1204 = vmatpush.msra.mxu0 %v706
    %1205 = vmatmul.f32.gmra.mxu0 %v1187
    %v1206 = vpop.f32.mrf.mxu0
    %v1207 = vadd.f32 0.0, %v1206
    %1208 = vdwg.mxu0
    %v1210 = vrot.slane %v1207, 2
    %v1212 = vadd.f32 %v704, %v1210
    %v1213 = vxor.u32 %v1212, 2147483648
    %v1214 = vmul.f32 %v1213, 1.442695
    %v1215 = vpow.pop %v1214
    %v1216 = vadd.f32 %v1215, 1.0
    %v1217 = vrcp.pop %v1216
    %v1218 = vmul.f32 %v1216, %v1217
    %v1219 = vsub.f32 1.0, %v1218
    %v1220 = vmul.f32 %v1217, %v1219
    %v1221 = vadd.f32 %v1217, %v1220
    %vm1222 = vweird.f32 %v1216
    %vm1223 = vweird.f32 %v1217
    %vm1224 = vmor %vm1222, %vm1223
    %v1225 = vsel %vm1224, %v1217, %v1221
    %v1226 = vand.u32 2147483647, %v1216
    %vm1227 = vcmp.eq.f32.partialorder %v1226, 8.507059e+37
    %v1228 = vand.u32 %v1216, 2147483648
    %v1229 = vor.u32 1.1754944e-38, %v1228
    %v1230 = vsel %vm1227, %v1229, %v1225
    %v1231 = vmul.f32 1.0, %v1230
    %v1232 = vtanh.pop %v1212
    %v1234 = vrot.slane %v1176, 6
    %v1236 = vmul.f32 %v1231, %v1234
    %1238 = vrot.lane.b32.xlu0 %v1232, 64
    %v1239 = vpop.permute.xlu0 %1238
    %v1241 = vmul.f32 %v1231, %v1239
    %1243 = vrot.lane.b32.xlu0 %v1241, 32
    %v1244 = vpop.permute.xlu0 %1243
    %v1246 = vadd.f32 %v1236, %v1244
    %v1247 = vtanh.pop %v1246
    %1249 = vrot.lane.b32.xlu0 %v1247, 64
    %v1250 = vpop.permute.xlu0 %1249
    %v1252 = vmul.f32 %v1231, %v1250
    %v1253 = vld [vmem:[%s7] sm:$0xff]
    %v1254 = vld [vmem:[%s7 + $0x8] sm:$0xff]
    %v1255 = vld [vmem:[%s7 + $0x10] sm:$0xff]
    %v1256 = vld [vmem:[%s7 + $0x18] sm:$0xff]
    %v1257 = vld [vmem:[%s8] sm:$0x1]
    %v1259 = vperm.slane %v1257, 0
    %v1262 = vrot.slane %v1252, 6
    %1263 = vrot.lane.b32.xlu0 %v1262, 32
    %v1264 = vpop.permute.xlu0 %1263
    %v1265 = vsel %vm110, %v1264, 0
    %1267 = vmatpush.msra.mxu0 0.0
    %1268 = vmatpush.msra.mxu0 0.0
    %1269 = vmatpush.msra.mxu0 0.0
    %1270 = vmatpush.msra.mxu0 0.0
    %1271 = vmatpush.msra.mxu0 0.0
    %1272 = vmatpush.msra.mxu0 0.0
    %1273 = vmatpush.msra.mxu0 0.0
    %1274 = vmatpush.msra.mxu0 0.0
    %1275 = vmatpush.msra.mxu0 0.0
    %1276 = vmatpush.msra.mxu0 0.0
    %1277 = vmatpush.msra.mxu0 0.0
    %1278 = vmatpush.msra.mxu0 0.0
    %1279 = vmatpush.msra.mxu0 %v1256
    %1280 = vmatpush.msra.mxu0 %v1255
    %1281 = vmatpush.msra.mxu0 %v1254
    %1282 = vmatpush.msra.mxu0 %v1253
    %1283 = vmatmul.f32.gmra.mxu0 %v1265
    %v1284 = vpop.f32.mrf.mxu0
    %v1285 = vadd.f32 %v1259, %v1284
    %1286 = vdwg.mxu0
    %vm1287 = vcmask 25600
    %1288 = vst.msk [vmem:[#allocation7] sm:$0x3] %vm1287, %v1285
    // Predicated region
    $region46: #{lstm_decoder_forward.1} parent=1 // pred_check
      _
    $region47: #{lstm_decoder_forward.1} parent=1 // pred_check_branch
      %1290 = sbr.rel (0) target = $region49
    $region48: #{lstm_decoder_forward.1} parent=1 // pred_region
      %1292 = vsyncadd [#allocation4], 0
      %s1294 = sshll.u32 [#allocation7], 4
      %s1295 = int_to_ptr.vmem [resolvable:$true] %s1294
      %s1296 = sshll.u32 %s9, 4
      %s1297 = int_to_ptr.hbm [resolvable:$true] %s1296
      %1299 = dma.vmem_to_hbm [thread:$0]  %s1295, 32, %s1297, [#allocation4]
    $region49: #{lstm_decoder_forward.1} parent=1 // pred_fallthru
      _
    // Predicated region
    $region50: #{lstm_decoder_forward.1} parent=1 // pred_check
      _
    $region51: #{lstm_decoder_forward.1} parent=1 // pred_check_branch
      %1301 = sbr.rel (0) target = $region53
    $region52: #{lstm_decoder_forward.1} parent=1 // pred_region
      %1303 = dma.done [#allocation4], 32
    $region53: #{lstm_decoder_forward.1} parent=1 // pred_fallthru
      _
    %1304 = vsyncpa [#allocation3], 1
    %1305 = vsyncpa [#allocation6], 1
    %1306 = vsyncpa [#allocation4], 1

</llo_original>
